<compile_context>
chip_gen: v6e
topology: v6e:2x2x1
jax: 0.10.0
libtpu: 0.0.40
codegen_flags: <defaults>
</compile_context>

<pallas_src>
import functools

import jax
import jax.numpy as jnp
from jax.experimental import pallas as pl
from jax.experimental.pallas import tpu as pltpu

_VMEM = pltpu.MemorySpace.VMEM
_SMEM = pltpu.MemorySpace.SMEM


# ----------------------------- Pallas kernel --------------------------------


def _lstm_cell(gates, c_prev, H):
    """Single-direction LSTM cell on pre-summed gate pre-activations (B, 4H)."""
    i_g = jax.nn.sigmoid(gates[:, 0 * H:1 * H])
    f_g = jax.nn.sigmoid(gates[:, 1 * H:2 * H])
    g_g = jnp.tanh(gates[:, 2 * H:3 * H])
    o_g = jax.nn.sigmoid(gates[:, 3 * H:4 * H])
    c_new = f_g * c_prev + i_g * g_g
    h_new = o_g * jnp.tanh(c_new)
    return h_new, c_new


def _lstm_net_kernel(*refs, n_layers, T, B, H, E):
    """Whole LSTM_net forward in one kernel.

    Inputs (refs, in order):
      lens   : (B, 1) int32 VMEM            per-sample sequence lengths
      nsteps : (1,)   int32 SMEM            max(text_lengths) -> dynamic loop bound
      x      : (T, B, E) f32 VMEM           embedded input
      per layer l (n_layers times):
        w_ih_l : (Din_l, 8H)  columns = [fwd i,f,g,o | bwd i,f,g,o]; Din_0=E, else 2H
        w_hh_l : (2H, 8H)     block-diagonal: rows[:H]->fwd gates, rows[H:]->bwd gates
        b_l    : (1, 8H)      b_ih + b_hh for both directions
      fc1_w (2H,H), fc1_b (1,H), fc2_w (H,1), fc2_b (1,1)
    Output:
      out (B, 1)
    Scratch:
      xp (T,B,8H)  gate pre-activations of the current layer
      yf (T,B,H)   forward  outputs of the previous layer (inter-layer, VMEM only)
      yb (T,B,H)   backward outputs of the previous layer (inter-layer, VMEM only)
      h  (B,2H), c (B,2H)  shared fwd|bwd state slabs
    """
    lens_ref = refs[0]
    nsteps_ref = refs[1]
    x_ref = refs[2]
    idx = 3
    layer_refs = []
    for _ in range(n_layers):
        layer_refs.append((refs[idx], refs[idx + 1], refs[idx + 2]))
        idx += 3
    fc1w_ref, fc1b_ref, fc2w_ref, fc2b_ref = refs[idx:idx + 4]
    idx += 4
    out_ref = refs[idx]
    xp_scr, yf_scr, yb_scr, h_scr, c_scr = refs[idx + 1:idx + 6]

    G = 8 * H
    lens = lens_ref[...]                    # (B, 1) int32, hoisted
    nsteps = nsteps_ref[0]                  # dynamic trip count = max sequence length

    # Inter-layer buffers: positions with t >= length are kept zero (pack_padded semantics).
    yf_scr[...] = jnp.zeros_like(yf_scr)
    yb_scr[...] = jnp.zeros_like(yb_scr)

    for l in range(n_layers):
        w_ih_ref, w_hh_ref, b_ref = layer_refs[l]
        last = (l == n_layers - 1)

        # ---- prologue: hoisted input projection, one big GEMM over all timesteps ----
        if l == 0:
            x2d = x_ref[...].reshape(T * B, E)
            proj = jnp.dot(x2d, w_ih_ref[...], preferred_element_type=jnp.float32)
        else:
            # previous layer's fwd/bwd outputs consumed as two streams (no concat)
            yf2d = yf_scr[...].reshape(T * B, H)
            yb2d = yb_scr[...].reshape(T * B, H)
            w_ih = w_ih_ref[...]
            proj = (jnp.dot(yf2d, w_ih[:H, :], preferred_element_type=jnp.float32)
                    + jnp.dot(yb2d, w_ih[H:, :], preferred_element_type=jnp.float32))
        xp_scr[...] = (proj + b_ref[...]).reshape(T, B, G)   # bias added once, not per step

        h_scr[...] = jnp.zeros_like(h_scr)
        c_scr[...] = jnp.zeros_like(c_scr)
        w_hh = w_hh_ref[...]                # (2H, 8H), hoisted out of the loop

        # ---- recurrence: only h @ W_hh stays inside the loop ----
        @pl.loop(0, nsteps)
        def _(i):
            tf = i                          # forward time index
            tb = nsteps - 1 - i             # backward time index
            h_prev = h_scr[...]             # (B, 2H) = [h_fwd | h_bwd]
            c_prev = c_scr[...]
            gh = jnp.dot(h_prev, w_hh, preferred_element_type=jnp.float32)   # (B, 8H)
            g_f = gh[:, 0:4 * H] + xp_scr[tf][:, 0:4 * H]
            g_b = gh[:, 4 * H:8 * H] + xp_scr[tb][:, 4 * H:8 * H]
            h_f, c_f = _lstm_cell(g_f, c_prev[:, 0:H], H)
            h_b, c_b = _lstm_cell(g_b, c_prev[:, H:2 * H], H)
            valid_f = lens > tf             # (B, 1) pack_padded masking
            valid_b = lens > tb
            h_f_u = jnp.where(valid_f, h_f, h_prev[:, 0:H])
            c_f_u = jnp.where(valid_f, c_f, c_prev[:, 0:H])
            h_b_u = jnp.where(valid_b, h_b, h_prev[:, H:2 * H])
            c_b_u = jnp.where(valid_b, c_b, c_prev[:, H:2 * H])
            h_scr[...] = jnp.concatenate([h_f_u, h_b_u], axis=1)
            c_scr[...] = jnp.concatenate([c_f_u, c_b_u], axis=1)
            if not last:                    # last layer's per-step outputs are never read
                yf_scr[tf] = jnp.where(valid_f, h_f, jnp.zeros_like(h_f))
                yb_scr[tb] = jnp.where(valid_b, h_b, jnp.zeros_like(h_b))

    # ---- epilogue: fused fc1 -> fc2 head on the final hidden state ----
    hidden = h_scr[...]                     # (B, 2H) == torch.cat((hidden[-2], hidden[-1]), 1)
    h1 = jnp.dot(hidden, fc1w_ref[...], preferred_element_type=jnp.float32) + fc1b_ref[...]
    out_ref[...] = jnp.dot(h1, fc2w_ref[...], preferred_element_type=jnp.float32) + fc2b_ref[...]


# ------------------------------ Python wrapper -------------------------------


def _pack_layer(dirs, H):
    """Pack per-direction PyTorch-style weights into the fused kernel layout."""
    (w_ih_f, w_hh_f, b_f), (w_ih_b, w_hh_b, b_b) = dirs
    w_ih_cat = jnp.concatenate([w_ih_f, w_ih_b], axis=1)          # (Din, 8H)
    w_hh_blk = jnp.zeros((2 * H, 8 * H), jnp.float32)             # block-diagonal (2H, 8H)
    w_hh_blk = w_hh_blk.at[:H, :4 * H].set(w_hh_f)
    w_hh_blk = w_hh_blk.at[H:, 4 * H:].set(w_hh_b)
    b_cat = jnp.concatenate([b_f, b_b], axis=1)                   # (1, 8H)
    return w_ih_cat, w_hh_blk, b_cat


@jax.jit
def lstm_net_forward(text, text_lengths, params):
    """Full forward pass of LSTM_net (eval mode: dropout = identity)."""
    emb = params["embedding"]
    # Embedding lookup is glue (gather) in plain JAX.
    x = jnp.take(emb, text, axis=0).astype(jnp.float32)       # (T, B, E)
    T, B, E = x.shape
    H = params["lstm"][0][0][1].shape[0]
    n_layers = len(params["lstm"])

    # Pad batch to a multiple of 8 sublanes so every (B, *) tile is dense.
    B_pad = max(8, ((B + 7) // 8) * 8)
    lengths = text_lengths.astype(jnp.int32)
    if B_pad != B:
        x = jnp.pad(x, ((0, 0), (0, B_pad - B), (0, 0)))
        lengths = jnp.pad(lengths, (0, B_pad - B))             # padded rows have length 0
    lens2d = lengths.reshape(-1, 1)                            # (B_pad, 1)
    nsteps = jnp.max(lengths).reshape(1)                       # (1,) loop bound (SMEM)

    inputs = [lens2d, nsteps, x]
    for dirs in params["lstm"]:
        w_ih_cat, w_hh_blk, b_cat = _pack_layer(dirs, H)
        inputs += [w_ih_cat, w_hh_blk, b_cat]
    inputs += [params["fc1_w"], params["fc1_b"], params["fc2_w"], params["fc2_b"]]

    kernel = functools.partial(_lstm_net_kernel, n_layers=n_layers, T=T, B=B_pad, H=H, E=E)
    in_specs = ([pl.BlockSpec(memory_space=_VMEM), pl.BlockSpec(memory_space=_SMEM)]
                + [pl.BlockSpec(memory_space=_VMEM)] * (len(inputs) - 2))
    scratch_shapes = [pltpu.VMEM((T, B_pad, 8 * H), jnp.float32),   # precomputed input gates
                      pltpu.VMEM((T, B_pad, H), jnp.float32),       # prev-layer fwd outputs
                      pltpu.VMEM((T, B_pad, H), jnp.float32),       # prev-layer bwd outputs
                      pltpu.VMEM((B_pad, 2 * H), jnp.float32),      # h (fwd | bwd)
                      pltpu.VMEM((B_pad, 2 * H), jnp.float32)]      # c (fwd | bwd)

    out = pl.pallas_call(
        kernel,
        out_shape=jax.ShapeDtypeStruct((B_pad, 1), jnp.float32),
        in_specs=in_specs,
        out_specs=pl.BlockSpec(memory_space=_VMEM),
        scratch_shapes=scratch_shapes,
        compiler_params=pltpu.CompilerParams(vmem_limit_bytes=64 * 1024 * 1024),
    )(*inputs)

    # TODO(synk): nn.Dropout is identity in eval mode; no dropout RNG is applied here.
    # TODO(synk): bf16 MXU operands (v6e/v7x) kept out for exact f32 parity with the reference.
    return out[:B]                                             # (B, 1)


# ------------------------------ parameter init ------------------------------


def init_params(key, vocab_size, embedding_dim, hidden_dim, n_layers, pad_idx):
    keys = iter(jax.random.split(key, 64))
    emb = jax.random.normal(next(keys), (vocab_size, embedding_dim), jnp.float32) * 0.1
    emb = emb.at[pad_idx].set(0.0)  # padding_idx row is zero

    lstm = []
    for layer in range(n_layers):
        d_in = embedding_dim if layer == 0 else 2 * hidden_dim
        dirs = []
        for _ in range(2):  # forward, backward
            w_ih = jax.random.normal(next(keys), (d_in, 4 * hidden_dim), jnp.float32) * 0.1
            w_hh = jax.random.normal(next(keys), (hidden_dim, 4 * hidden_dim), jnp.float32) * 0.1
            b = jax.random.normal(next(keys), (1, 4 * hidden_dim), jnp.float32) * 0.1
            dirs.append((w_ih, w_hh, b))
        lstm.append(dirs)

    fc1_w = jax.random.normal(next(keys), (2 * hidden_dim, hidden_dim), jnp.float32) * 0.1
    fc1_b = jax.random.normal(next(keys), (1, hidden_dim), jnp.float32) * 0.1
    fc2_w = jax.random.normal(next(keys), (hidden_dim, 1), jnp.float32) * 0.1
    fc2_b = jax.random.normal(next(keys), (1, 1), jnp.float32) * 0.1

    return {"embedding": emb, "lstm": lstm,
            "fc1_w": fc1_w, "fc1_b": fc1_b, "fc2_w": fc2_w, "fc2_b": fc2_b}


# ----------------------------------- main -----------------------------------

if __name__ == "__main__":
    VOCAB, E, H, L, PAD = 50, 32, 32, 2, 1
    T, B = 8, 2

    key = jax.random.PRNGKey(0)
    k_text, k_params = jax.random.split(key)

    # lengths sorted descending (pack_padded_sequence default requirement)
    text_lengths = jnp.array([8, 5], dtype=jnp.int32)
    text = jax.random.randint(k_text, (T, B), 2, VOCAB, dtype=jnp.int32)  # (T, B)
    # put PAD token at padded positions (t >= length)
    t_idx = jnp.arange(T)[:, None]
    text = jnp.where(t_idx < text_lengths[None, :], text, PAD)

    params = init_params(k_params, VOCAB, E, H, L, PAD)

    out = lstm_net_forward(text, text_lengths, params)   # (B, 1)
    out = jax.block_until_ready(out)
    assert out.shape == (B, 1) and out.dtype == jnp.float32
    print("KERNEL_OK")
</pallas_src>

<mosaic_0001>
module attributes {stable_mosaic.version = 11 : i64} {
  func.func @_lstm_net_kernel(%arg0: memref<8x1xi32, #tpu.memory_space<vmem>>, %arg1: memref<1xi32, #tpu.memory_space<smem>>, %arg2: memref<8x8x32xf32, #tpu.memory_space<vmem>>, %arg3: memref<32x256xf32, #tpu.memory_space<vmem>>, %arg4: memref<64x256xf32, #tpu.memory_space<vmem>>, %arg5: memref<1x256xf32, #tpu.memory_space<vmem>>, %arg6: memref<64x256xf32, #tpu.memory_space<vmem>>, %arg7: memref<64x256xf32, #tpu.memory_space<vmem>>, %arg8: memref<1x256xf32, #tpu.memory_space<vmem>>, %arg9: memref<64x32xf32, #tpu.memory_space<vmem>>, %arg10: memref<1x32xf32, #tpu.memory_space<vmem>>, %arg11: memref<32x1xf32, #tpu.memory_space<vmem>>, %arg12: memref<1x1xf32, #tpu.memory_space<vmem>>, %arg13: memref<8x1xf32, #tpu.memory_space<vmem>>, %arg14: memref<8x8x256xf32, #tpu.memory_space<vmem>>, %arg15: memref<8x8x32xf32, #tpu.memory_space<vmem>>, %arg16: memref<8x8x32xf32, #tpu.memory_space<vmem>>, %arg17: memref<8x64xf32, #tpu.memory_space<vmem>>, %arg18: memref<8x64xf32, #tpu.memory_space<vmem>>) attributes {dimension_semantics = [], scalar_prefetch = 0 : i64, scratch_operands = 5 : i64, tpu.core_type = #tpu.core_type<tc>} {
    %c0 = arith.constant 0 : index
    %c0_0 = arith.constant 0 : index
    %0 = vector.load %arg0[%c0, %c0_0] : memref<8x1xi32, #tpu.memory_space<vmem>>, vector<8x1xi32>
    %c0_1 = arith.constant 0 : index
    %1 = memref.load %arg1[%c0_1] : memref<1xi32, #tpu.memory_space<smem>>
    %cst = arith.constant 0.000000e+00 : f32
    %2 = vector.broadcast %cst : f32 to vector<8x8x32xf32>
    %c0_2 = arith.constant 0 : index
    %c0_3 = arith.constant 0 : index
    %c0_4 = arith.constant 0 : index
    %3 = vector.load %arg15[%c0_2, %c0_3, %c0_4] : memref<8x8x32xf32, #tpu.memory_space<vmem>>, vector<8x8x32xf32>
    tpu.vector_store %arg15[%c0_2, %c0_3, %c0_4], %2 {strides = array<i32>} : memref<8x8x32xf32, #tpu.memory_space<vmem>>, vector<8x8x32xf32>,
    %cst_5 = arith.constant 0.000000e+00 : f32
    %4 = vector.broadcast %cst_5 : f32 to vector<8x8x32xf32>
    %c0_6 = arith.constant 0 : index
    %c0_7 = arith.constant 0 : index
    %c0_8 = arith.constant 0 : index
    %5 = vector.load %arg16[%c0_6, %c0_7, %c0_8] : memref<8x8x32xf32, #tpu.memory_space<vmem>>, vector<8x8x32xf32>
    tpu.vector_store %arg16[%c0_6, %c0_7, %c0_8], %4 {strides = array<i32>} : memref<8x8x32xf32, #tpu.memory_space<vmem>>, vector<8x8x32xf32>,
    %c0_9 = arith.constant 0 : index
    %c0_10 = arith.constant 0 : index
    %c0_11 = arith.constant 0 : index
    %6 = vector.load %arg2[%c0_9, %c0_10, %c0_11] : memref<8x8x32xf32, #tpu.memory_space<vmem>>, vector<8x8x32xf32>
    %7 = vector.shape_cast %6 : vector<8x8x32xf32> to vector<64x32xf32>
    %c0_12 = arith.constant 0 : index
    %c0_13 = arith.constant 0 : index
    %8 = vector.load %arg3[%c0_12, %c0_13] : memref<32x256xf32, #tpu.memory_space<vmem>>, vector<32x256xf32>
    %cst_14 = arith.constant dense<0.000000e+00> : vector<64x256xf32>
    %9 = tpu.matmul %7, %8, %cst_14 {dimension_numbers = #tpu.dot_dimension_numbers<[1], [0], [0], [1], [0, 0, 1, 1], [], []>} : vector<64x32xf32>, vector<32x256xf32>, vector<64x256xf32> -> vector<64x256xf32>
    %c0_15 = arith.constant 0 : index
    %c0_16 = arith.constant 0 : index
    %10 = vector.load %arg5[%c0_15, %c0_16] : memref<1x256xf32, #tpu.memory_space<vmem>>, vector<1x256xf32>
    %11 = vector.broadcast %10 : vector<1x256xf32> to vector<64x256xf32>
    %12 = arith.addf %9, %11 : vector<64x256xf32>
    %13 = vector.shape_cast %12 : vector<64x256xf32> to vector<8x8x256xf32>
    %c0_17 = arith.constant 0 : index
    %c0_18 = arith.constant 0 : index
    %c0_19 = arith.constant 0 : index
    %14 = vector.load %arg14[%c0_17, %c0_18, %c0_19] : memref<8x8x256xf32, #tpu.memory_space<vmem>>, vector<8x8x256xf32>
    tpu.vector_store %arg14[%c0_17, %c0_18, %c0_19], %13 {strides = array<i32>} : memref<8x8x256xf32, #tpu.memory_space<vmem>>, vector<8x8x256xf32>,
    %cst_20 = arith.constant 0.000000e+00 : f32
    %15 = vector.broadcast %cst_20 : f32 to vector<8x64xf32>
    %c0_21 = arith.constant 0 : index
    %c0_22 = arith.constant 0 : index
    %16 = vector.load %arg17[%c0_21, %c0_22] : memref<8x64xf32, #tpu.memory_space<vmem>>, vector<8x64xf32>
    tpu.vector_store %arg17[%c0_21, %c0_22], %15 {strides = array<i32>} : memref<8x64xf32, #tpu.memory_space<vmem>>, vector<8x64xf32>,
    %cst_23 = arith.constant 0.000000e+00 : f32
    %17 = vector.broadcast %cst_23 : f32 to vector<8x64xf32>
    %c0_24 = arith.constant 0 : index
    %c0_25 = arith.constant 0 : index
    %18 = vector.load %arg18[%c0_24, %c0_25] : memref<8x64xf32, #tpu.memory_space<vmem>>, vector<8x64xf32>
    tpu.vector_store %arg18[%c0_24, %c0_25], %17 {strides = array<i32>} : memref<8x64xf32, #tpu.memory_space<vmem>>, vector<8x64xf32>,
    %c0_26 = arith.constant 0 : index
    %c0_27 = arith.constant 0 : index
    %19 = vector.load %arg4[%c0_26, %c0_27] : memref<64x256xf32, #tpu.memory_space<vmem>>, vector<64x256xf32>
    %c0_i32 = arith.constant 0 : i32
    %20 = arith.subi %1, %c0_i32 : i32
    %c1_i32 = arith.constant 1 : i32
    %c1_i32_28 = arith.constant 1 : i32
    %21 = arith.subi %c1_i32, %c1_i32_28 : i32
    %22 = arith.addi %20, %21 : i32
    %c1_i32_29 = arith.constant 1 : i32
    %23 = arith.divsi %22, %c1_i32_29 : i32
    %c1_i32_30 = arith.constant 1 : i32
    %c0_i32_31 = arith.constant 0 : i32
    %c0_i32_32 = arith.constant 0 : i32
    %24 = arith.subi %23, %c0_i32_32 : i32
    %25 = arith.addi %c0_i32_32, %24 : i32
    %c1_i32_33 = arith.constant 1 : i32
    scf.for %arg19 = %c0_i32_32 to %25 step %c1_i32_33  : i32 {
      %64 = arith.muli %arg19, %c1_i32_30 : i32
      %65 = arith.addi %c0_i32_31, %64 : i32
      %c1_i32_79 = arith.constant 1 : i32
      %66 = arith.subi %1, %c1_i32_79 : i32
      %67 = arith.subi %66, %65 : i32
      %c0_80 = arith.constant 0 : index
      %c0_81 = arith.constant 0 : index
      %68 = vector.load %arg17[%c0_80, %c0_81] : memref<8x64xf32, #tpu.memory_space<vmem>>, vector<8x64xf32>
      %c0_82 = arith.constant 0 : index
      %c0_83 = arith.constant 0 : index
      %69 = vector.load %arg18[%c0_82, %c0_83] : memref<8x64xf32, #tpu.memory_space<vmem>>, vector<8x64xf32>
      %cst_84 = arith.constant dense<0.000000e+00> : vector<8x256xf32>
      %70 = tpu.matmul %68, %19, %cst_84 {dimension_numbers = #tpu.dot_dimension_numbers<[1], [0], [0], [1], [0, 0, 1, 1], [], []>} : vector<8x64xf32>, vector<64x256xf32>, vector<8x256xf32> -> vector<8x256xf32>
      %71 = vector.extract_strided_slice %70 {offsets = [0, 0], sizes = [8, 128], strides = [1, 1]} : vector<8x256xf32> to vector<8x128xf32>
      %72 = arith.index_cast %65 : i32 to index
      %c0_85 = arith.constant 0 : index
      %c0_86 = arith.constant 0 : index
      %73 = vector.load %arg14[%72, %c0_85, %c0_86] : memref<8x8x256xf32, #tpu.memory_space<vmem>>, vector<1x8x256xf32>
      %74 = vector.shape_cast %73 : vector<1x8x256xf32> to vector<8x256xf32>
      %75 = vector.extract_strided_slice %74 {offsets = [0, 0], sizes = [8, 128], strides = [1, 1]} : vector<8x256xf32> to vector<8x128xf32>
      %76 = arith.addf %71, %75 : vector<8x128xf32>
      %77 = vector.extract_strided_slice %70 {offsets = [0, 128], sizes = [8, 128], strides = [1, 1]} : vector<8x256xf32> to vector<8x128xf32>
      %78 = arith.index_cast %67 : i32 to index
      %c0_87 = arith.constant 0 : index
      %c0_88 = arith.constant 0 : index
      %79 = vector.load %arg14[%78, %c0_87, %c0_88] : memref<8x8x256xf32, #tpu.memory_space<vmem>>, vector<1x8x256xf32>
      %80 = vector.shape_cast %79 : vector<1x8x256xf32> to vector<8x256xf32>
      %81 = vector.extract_strided_slice %80 {offsets = [0, 128], sizes = [8, 128], strides = [1, 1]} : vector<8x256xf32> to vector<8x128xf32>
      %82 = arith.addf %77, %81 : vector<8x128xf32>
      %83 = vector.extract_strided_slice %69 {offsets = [0, 0], sizes = [8, 32], strides = [1, 1]} : vector<8x64xf32> to vector<8x32xf32>
      %84 = vector.extract_strided_slice %76 {offsets = [0, 0], sizes = [8, 32], strides = [1, 1]} : vector<8x128xf32> to vector<8x32xf32>
      %85 = arith.negf %84 : vector<8x32xf32>
      %86 = math.exp %85 : vector<8x32xf32>
      %cst_89 = arith.constant 1.000000e+00 : f32
      %87 = vector.broadcast %cst_89 : f32 to vector<8x32xf32>
      %88 = arith.addf %87, %86 : vector<8x32xf32>
      %89 = arith.divf %87, %88 : vector<8x32xf32>
      %90 = vector.extract_strided_slice %76 {offsets = [0, 32], sizes = [8, 32], strides = [1, 1]} : vector<8x128xf32> to vector<8x32xf32>
      %91 = arith.negf %90 : vector<8x32xf32>
      %92 = math.exp %91 : vector<8x32xf32>
      %cst_90 = arith.constant 1.000000e+00 : f32
      %93 = vector.broadcast %cst_90 : f32 to vector<8x32xf32>
      %94 = arith.addf %93, %92 : vector<8x32xf32>
      %95 = arith.divf %93, %94 : vector<8x32xf32>
      %96 = vector.extract_strided_slice %76 {offsets = [0, 64], sizes = [8, 32], strides = [1, 1]} : vector<8x128xf32> to vector<8x32xf32>
      %97 = math.tanh %96 : vector<8x32xf32>
      %98 = vector.extract_strided_slice %76 {offsets = [0, 96], sizes = [8, 32], strides = [1, 1]} : vector<8x128xf32> to vector<8x32xf32>
      %99 = arith.negf %98 : vector<8x32xf32>
      %100 = math.exp %99 : vector<8x32xf32>
      %cst_91 = arith.constant 1.000000e+00 : f32
      %101 = vector.broadcast %cst_91 : f32 to vector<8x32xf32>
      %102 = arith.addf %101, %100 : vector<8x32xf32>
      %103 = arith.divf %101, %102 : vector<8x32xf32>
      %104 = arith.mulf %95, %83 : vector<8x32xf32>
      %105 = arith.mulf %89, %97 : vector<8x32xf32>
      %106 = arith.addf %104, %105 : vector<8x32xf32>
      %107 = math.tanh %106 : vector<8x32xf32>
      %108 = arith.mulf %103, %107 : vector<8x32xf32>
      %109 = vector.extract_strided_slice %69 {offsets = [0, 32], sizes = [8, 32], strides = [1, 1]} : vector<8x64xf32> to vector<8x32xf32>
      %110 = vector.extract_strided_slice %82 {offsets = [0, 0], sizes = [8, 32], strides = [1, 1]} : vector<8x128xf32> to vector<8x32xf32>
      %111 = arith.negf %110 : vector<8x32xf32>
      %112 = math.exp %111 : vector<8x32xf32>
      %cst_92 = arith.constant 1.000000e+00 : f32
      %113 = vector.broadcast %cst_92 : f32 to vector<8x32xf32>
      %114 = arith.addf %113, %112 : vector<8x32xf32>
      %115 = arith.divf %113, %114 : vector<8x32xf32>
      %116 = vector.extract_strided_slice %82 {offsets = [0, 32], sizes = [8, 32], strides = [1, 1]} : vector<8x128xf32> to vector<8x32xf32>
      %117 = arith.negf %116 : vector<8x32xf32>
      %118 = math.exp %117 : vector<8x32xf32>
      %cst_93 = arith.constant 1.000000e+00 : f32
      %119 = vector.broadcast %cst_93 : f32 to vector<8x32xf32>
      %120 = arith.addf %119, %118 : vector<8x32xf32>
      %121 = arith.divf %119, %120 : vector<8x32xf32>
      %122 = vector.extract_strided_slice %82 {offsets = [0, 64], sizes = [8, 32], strides = [1, 1]} : vector<8x128xf32> to vector<8x32xf32>
      %123 = math.tanh %122 : vector<8x32xf32>
      %124 = vector.extract_strided_slice %82 {offsets = [0, 96], sizes = [8, 32], strides = [1, 1]} : vector<8x128xf32> to vector<8x32xf32>
      %125 = arith.negf %124 : vector<8x32xf32>
      %126 = math.exp %125 : vector<8x32xf32>
      %cst_94 = arith.constant 1.000000e+00 : f32
      %127 = vector.broadcast %cst_94 : f32 to vector<8x32xf32>
      %128 = arith.addf %127, %126 : vector<8x32xf32>
      %129 = arith.divf %127, %128 : vector<8x32xf32>
      %130 = arith.mulf %121, %109 : vector<8x32xf32>
      %131 = arith.mulf %115, %123 : vector<8x32xf32>
      %132 = arith.addf %130, %131 : vector<8x32xf32>
      %133 = math.tanh %132 : vector<8x32xf32>
      %134 = arith.mulf %129, %133 : vector<8x32xf32>
      %135 = vector.broadcast %65 : i32 to vector<8x1xi32>
      %136 = arith.cmpi sgt, %0, %135 : vector<8x1xi32>
      %137 = vector.broadcast %67 : i32 to vector<8x1xi32>
      %138 = arith.cmpi sgt, %0, %137 : vector<8x1xi32>
      %139 = vector.extract_strided_slice %68 {offsets = [0, 0], sizes = [8, 32], strides = [1, 1]} : vector<8x64xf32> to vector<8x32xf32>
      %140 = vector.shape_cast %136 : vector<8x1xi1> to vector<8x1xi1>
      %141 = vector.broadcast %140 : vector<8x1xi1> to vector<8x32xi1>
      %142 = arith.select %141, %108, %139 : vector<8x32xi1>, vector<8x32xf32>
      %143 = vector.extract_strided_slice %69 {offsets = [0, 0], sizes = [8, 32], strides = [1, 1]} : vector<8x64xf32> to vector<8x32xf32>
      %144 = vector.shape_cast %136 : vector<8x1xi1> to vector<8x1xi1>
      %145 = vector.broadcast %144 : vector<8x1xi1> to vector<8x32xi1>
      %146 = arith.select %145, %106, %143 : vector<8x32xi1>, vector<8x32xf32>
      %147 = vector.extract_strided_slice %68 {offsets = [0, 32], sizes = [8, 32], strides = [1, 1]} : vector<8x64xf32> to vector<8x32xf32>
      %148 = vector.shape_cast %138 : vector<8x1xi1> to vector<8x1xi1>
      %149 = vector.broadcast %148 : vector<8x1xi1> to vector<8x32xi1>
      %150 = arith.select %149, %134, %147 : vector<8x32xi1>, vector<8x32xf32>
      %151 = vector.extract_strided_slice %69 {offsets = [0, 32], sizes = [8, 32], strides = [1, 1]} : vector<8x64xf32> to vector<8x32xf32>
      %152 = vector.shape_cast %138 : vector<8x1xi1> to vector<8x1xi1>
      %153 = vector.broadcast %152 : vector<8x1xi1> to vector<8x32xi1>
      %154 = arith.select %153, %132, %151 : vector<8x32xi1>, vector<8x32xf32>
      %155 = tpu.concatenate %142, %150 in 1 : vector<8x32xf32>, vector<8x32xf32> -> vector<8x64xf32>
      %c0_95 = arith.constant 0 : index
      %c0_96 = arith.constant 0 : index
      %156 = vector.load %arg17[%c0_95, %c0_96] : memref<8x64xf32, #tpu.memory_space<vmem>>, vector<8x64xf32>
      tpu.vector_store %arg17[%c0_95, %c0_96], %155 {strides = array<i32>} : memref<8x64xf32, #tpu.memory_space<vmem>>, vector<8x64xf32>,
      %157 = tpu.concatenate %146, %154 in 1 : vector<8x32xf32>, vector<8x32xf32> -> vector<8x64xf32>
      %c0_97 = arith.constant 0 : index
      %c0_98 = arith.constant 0 : index
      %158 = vector.load %arg18[%c0_97, %c0_98] : memref<8x64xf32, #tpu.memory_space<vmem>>, vector<8x64xf32>
      tpu.vector_store %arg18[%c0_97, %c0_98], %157 {strides = array<i32>} : memref<8x64xf32, #tpu.memory_space<vmem>>, vector<8x64xf32>,
      %cst_99 = arith.constant 0.000000e+00 : f32
      %159 = vector.broadcast %cst_99 : f32 to vector<8x32xf32>
      %160 = vector.shape_cast %136 : vector<8x1xi1> to vector<8x1xi1>
      %161 = vector.broadcast %160 : vector<8x1xi1> to vector<8x32xi1>
      %162 = arith.select %161, %108, %159 : vector<8x32xi1>, vector<8x32xf32>
      %163 = arith.index_cast %65 : i32 to index
      %c0_100 = arith.constant 0 : index
      %c0_101 = arith.constant 0 : index
      %164 = vector.load %arg15[%163, %c0_100, %c0_101] : memref<8x8x32xf32, #tpu.memory_space<vmem>>, vector<1x8x32xf32>
      %165 = vector.shape_cast %164 : vector<1x8x32xf32> to vector<8x32xf32>
      %166 = vector.shape_cast %162 : vector<8x32xf32> to vector<1x8x32xf32>
      tpu.vector_store %arg15[%163, %c0_100, %c0_101], %166 {strides = array<i32>} : memref<8x8x32xf32, #tpu.memory_space<vmem>>, vector<1x8x32xf32>,
      %cst_102 = arith.constant 0.000000e+00 : f32
      %167 = vector.broadcast %cst_102 : f32 to vector<8x32xf32>
      %168 = vector.shape_cast %138 : vector<8x1xi1> to vector<8x1xi1>
      %169 = vector.broadcast %168 : vector<8x1xi1> to vector<8x32xi1>
      %170 = arith.select %169, %134, %167 : vector<8x32xi1>, vector<8x32xf32>
      %171 = arith.index_cast %67 : i32 to index
      %c0_103 = arith.constant 0 : index
      %c0_104 = arith.constant 0 : index
      %172 = vector.load %arg16[%171, %c0_103, %c0_104] : memref<8x8x32xf32, #tpu.memory_space<vmem>>, vector<1x8x32xf32>
      %173 = vector.shape_cast %172 : vector<1x8x32xf32> to vector<8x32xf32>
      %174 = vector.shape_cast %170 : vector<8x32xf32> to vector<1x8x32xf32>
      tpu.vector_store %arg16[%171, %c0_103, %c0_104], %174 {strides = array<i32>} : memref<8x8x32xf32, #tpu.memory_space<vmem>>, vector<1x8x32xf32>,
    }
    %c0_34 = arith.constant 0 : index
    %c0_35 = arith.constant 0 : index
    %c0_36 = arith.constant 0 : index
    %26 = vector.load %arg15[%c0_34, %c0_35, %c0_36] : memref<8x8x32xf32, #tpu.memory_space<vmem>>, vector<8x8x32xf32>
    %27 = vector.shape_cast %26 : vector<8x8x32xf32> to vector<64x32xf32>
    %c0_37 = arith.constant 0 : index
    %c0_38 = arith.constant 0 : index
    %c0_39 = arith.constant 0 : index
    %28 = vector.load %arg16[%c0_37, %c0_38, %c0_39] : memref<8x8x32xf32, #tpu.memory_space<vmem>>, vector<8x8x32xf32>
    %29 = vector.shape_cast %28 : vector<8x8x32xf32> to vector<64x32xf32>
    %c0_40 = arith.constant 0 : index
    %c0_41 = arith.constant 0 : index
    %30 = vector.load %arg6[%c0_40, %c0_41] : memref<64x256xf32, #tpu.memory_space<vmem>>, vector<64x256xf32>
    %31 = vector.extract_strided_slice %30 {offsets = [0, 0], sizes = [32, 256], strides = [1, 1]} : vector<64x256xf32> to vector<32x256xf32>
    %cst_42 = arith.constant dense<0.000000e+00> : vector<64x256xf32>
    %32 = tpu.matmul %27, %31, %cst_42 {dimension_numbers = #tpu.dot_dimension_numbers<[1], [0], [0], [1], [0, 0, 1, 1], [], []>} : vector<64x32xf32>, vector<32x256xf32>, vector<64x256xf32> -> vector<64x256xf32>
    %33 = vector.extract_strided_slice %30 {offsets = [32, 0], sizes = [32, 256], strides = [1, 1]} : vector<64x256xf32> to vector<32x256xf32>
    %cst_43 = arith.constant dense<0.000000e+00> : vector<64x256xf32>
    %34 = tpu.matmul %29, %33, %cst_43 {dimension_numbers = #tpu.dot_dimension_numbers<[1], [0], [0], [1], [0, 0, 1, 1], [], []>} : vector<64x32xf32>, vector<32x256xf32>, vector<64x256xf32> -> vector<64x256xf32>
    %35 = arith.addf %32, %34 : vector<64x256xf32>
    %c0_44 = arith.constant 0 : index
    %c0_45 = arith.constant 0 : index
    %36 = vector.load %arg8[%c0_44, %c0_45] : memref<1x256xf32, #tpu.memory_space<vmem>>, vector<1x256xf32>
    %37 = vector.broadcast %36 : vector<1x256xf32> to vector<64x256xf32>
    %38 = arith.addf %35, %37 : vector<64x256xf32>
    %39 = vector.shape_cast %38 : vector<64x256xf32> to vector<8x8x256xf32>
    %c0_46 = arith.constant 0 : index
    %c0_47 = arith.constant 0 : index
    %c0_48 = arith.constant 0 : index
    %40 = vector.load %arg14[%c0_46, %c0_47, %c0_48] : memref<8x8x256xf32, #tpu.memory_space<vmem>>, vector<8x8x256xf32>
    tpu.vector_store %arg14[%c0_46, %c0_47, %c0_48], %39 {strides = array<i32>} : memref<8x8x256xf32, #tpu.memory_space<vmem>>, vector<8x8x256xf32>,
    %cst_49 = arith.constant 0.000000e+00 : f32
    %41 = vector.broadcast %cst_49 : f32 to vector<8x64xf32>
    %c0_50 = arith.constant 0 : index
    %c0_51 = arith.constant 0 : index
    %42 = vector.load %arg17[%c0_50, %c0_51] : memref<8x64xf32, #tpu.memory_space<vmem>>, vector<8x64xf32>
    tpu.vector_store %arg17[%c0_50, %c0_51], %41 {strides = array<i32>} : memref<8x64xf32, #tpu.memory_space<vmem>>, vector<8x64xf32>,
    %cst_52 = arith.constant 0.000000e+00 : f32
    %43 = vector.broadcast %cst_52 : f32 to vector<8x64xf32>
    %c0_53 = arith.constant 0 : index
    %c0_54 = arith.constant 0 : index
    %44 = vector.load %arg18[%c0_53, %c0_54] : memref<8x64xf32, #tpu.memory_space<vmem>>, vector<8x64xf32>
    tpu.vector_store %arg18[%c0_53, %c0_54], %43 {strides = array<i32>} : memref<8x64xf32, #tpu.memory_space<vmem>>, vector<8x64xf32>,
    %c0_55 = arith.constant 0 : index
    %c0_56 = arith.constant 0 : index
    %45 = vector.load %arg7[%c0_55, %c0_56] : memref<64x256xf32, #tpu.memory_space<vmem>>, vector<64x256xf32>
    %c0_i32_57 = arith.constant 0 : i32
    %46 = arith.subi %1, %c0_i32_57 : i32
    %c1_i32_58 = arith.constant 1 : i32
    %c1_i32_59 = arith.constant 1 : i32
    %47 = arith.subi %c1_i32_58, %c1_i32_59 : i32
    %48 = arith.addi %46, %47 : i32
    %c1_i32_60 = arith.constant 1 : i32
    %49 = arith.divsi %48, %c1_i32_60 : i32
    %c1_i32_61 = arith.constant 1 : i32
    %c0_i32_62 = arith.constant 0 : i32
    %c0_i32_63 = arith.constant 0 : i32
    %50 = arith.subi %49, %c0_i32_63 : i32
    %51 = arith.addi %c0_i32_63, %50 : i32
    %c1_i32_64 = arith.constant 1 : i32
    scf.for %arg19 = %c0_i32_63 to %51 step %c1_i32_64  : i32 {
      %64 = arith.muli %arg19, %c1_i32_61 : i32
      %65 = arith.addi %c0_i32_62, %64 : i32
      %c1_i32_79 = arith.constant 1 : i32
      %66 = arith.subi %1, %c1_i32_79 : i32
      %67 = arith.subi %66, %65 : i32
      %c0_80 = arith.constant 0 : index
      %c0_81 = arith.constant 0 : index
      %68 = vector.load %arg17[%c0_80, %c0_81] : memref<8x64xf32, #tpu.memory_space<vmem>>, vector<8x64xf32>
      %c0_82 = arith.constant 0 : index
      %c0_83 = arith.constant 0 : index
      %69 = vector.load %arg18[%c0_82, %c0_83] : memref<8x64xf32, #tpu.memory_space<vmem>>, vector<8x64xf32>
      %cst_84 = arith.constant dense<0.000000e+00> : vector<8x256xf32>
      %70 = tpu.matmul %68, %45, %cst_84 {dimension_numbers = #tpu.dot_dimension_numbers<[1], [0], [0], [1], [0, 0, 1, 1], [], []>} : vector<8x64xf32>, vector<64x256xf32>, vector<8x256xf32> -> vector<8x256xf32>
      %71 = vector.extract_strided_slice %70 {offsets = [0, 0], sizes = [8, 128], strides = [1, 1]} : vector<8x256xf32> to vector<8x128xf32>
      %72 = arith.index_cast %65 : i32 to index
      %c0_85 = arith.constant 0 : index
      %c0_86 = arith.constant 0 : index
      %73 = vector.load %arg14[%72, %c0_85, %c0_86] : memref<8x8x256xf32, #tpu.memory_space<vmem>>, vector<1x8x256xf32>
      %74 = vector.shape_cast %73 : vector<1x8x256xf32> to vector<8x256xf32>
      %75 = vector.extract_strided_slice %74 {offsets = [0, 0], sizes = [8, 128], strides = [1, 1]} : vector<8x256xf32> to vector<8x128xf32>
      %76 = arith.addf %71, %75 : vector<8x128xf32>
      %77 = vector.extract_strided_slice %70 {offsets = [0, 128], sizes = [8, 128], strides = [1, 1]} : vector<8x256xf32> to vector<8x128xf32>
      %78 = arith.index_cast %67 : i32 to index
      %c0_87 = arith.constant 0 : index
      %c0_88 = arith.constant 0 : index
      %79 = vector.load %arg14[%78, %c0_87, %c0_88] : memref<8x8x256xf32, #tpu.memory_space<vmem>>, vector<1x8x256xf32>
      %80 = vector.shape_cast %79 : vector<1x8x256xf32> to vector<8x256xf32>
      %81 = vector.extract_strided_slice %80 {offsets = [0, 128], sizes = [8, 128], strides = [1, 1]} : vector<8x256xf32> to vector<8x128xf32>
      %82 = arith.addf %77, %81 : vector<8x128xf32>
      %83 = vector.extract_strided_slice %69 {offsets = [0, 0], sizes = [8, 32], strides = [1, 1]} : vector<8x64xf32> to vector<8x32xf32>
      %84 = vector.extract_strided_slice %76 {offsets = [0, 0], sizes = [8, 32], strides = [1, 1]} : vector<8x128xf32> to vector<8x32xf32>
      %85 = arith.negf %84 : vector<8x32xf32>
      %86 = math.exp %85 : vector<8x32xf32>
      %cst_89 = arith.constant 1.000000e+00 : f32
      %87 = vector.broadcast %cst_89 : f32 to vector<8x32xf32>
      %88 = arith.addf %87, %86 : vector<8x32xf32>
      %89 = arith.divf %87, %88 : vector<8x32xf32>
      %90 = vector.extract_strided_slice %76 {offsets = [0, 32], sizes = [8, 32], strides = [1, 1]} : vector<8x128xf32> to vector<8x32xf32>
      %91 = arith.negf %90 : vector<8x32xf32>
      %92 = math.exp %91 : vector<8x32xf32>
      %cst_90 = arith.constant 1.000000e+00 : f32
      %93 = vector.broadcast %cst_90 : f32 to vector<8x32xf32>
      %94 = arith.addf %93, %92 : vector<8x32xf32>
      %95 = arith.divf %93, %94 : vector<8x32xf32>
      %96 = vector.extract_strided_slice %76 {offsets = [0, 64], sizes = [8, 32], strides = [1, 1]} : vector<8x128xf32> to vector<8x32xf32>
      %97 = math.tanh %96 : vector<8x32xf32>
      %98 = vector.extract_strided_slice %76 {offsets = [0, 96], sizes = [8, 32], strides = [1, 1]} : vector<8x128xf32> to vector<8x32xf32>
      %99 = arith.negf %98 : vector<8x32xf32>
      %100 = math.exp %99 : vector<8x32xf32>
      %cst_91 = arith.constant 1.000000e+00 : f32
      %101 = vector.broadcast %cst_91 : f32 to vector<8x32xf32>
      %102 = arith.addf %101, %100 : vector<8x32xf32>
      %103 = arith.divf %101, %102 : vector<8x32xf32>
      %104 = arith.mulf %95, %83 : vector<8x32xf32>
      %105 = arith.mulf %89, %97 : vector<8x32xf32>
      %106 = arith.addf %104, %105 : vector<8x32xf32>
      %107 = math.tanh %106 : vector<8x32xf32>
      %108 = arith.mulf %103, %107 : vector<8x32xf32>
      %109 = vector.extract_strided_slice %69 {offsets = [0, 32], sizes = [8, 32], strides = [1, 1]} : vector<8x64xf32> to vector<8x32xf32>
      %110 = vector.extract_strided_slice %82 {offsets = [0, 0], sizes = [8, 32], strides = [1, 1]} : vector<8x128xf32> to vector<8x32xf32>
      %111 = arith.negf %110 : vector<8x32xf32>
      %112 = math.exp %111 : vector<8x32xf32>
      %cst_92 = arith.constant 1.000000e+00 : f32
      %113 = vector.broadcast %cst_92 : f32 to vector<8x32xf32>
      %114 = arith.addf %113, %112 : vector<8x32xf32>
      %115 = arith.divf %113, %114 : vector<8x32xf32>
      %116 = vector.extract_strided_slice %82 {offsets = [0, 32], sizes = [8, 32], strides = [1, 1]} : vector<8x128xf32> to vector<8x32xf32>
      %117 = arith.negf %116 : vector<8x32xf32>
      %118 = math.exp %117 : vector<8x32xf32>
      %cst_93 = arith.constant 1.000000e+00 : f32
      %119 = vector.broadcast %cst_93 : f32 to vector<8x32xf32>
      %120 = arith.addf %119, %118 : vector<8x32xf32>
      %121 = arith.divf %119, %120 : vector<8x32xf32>
      %122 = vector.extract_strided_slice %82 {offsets = [0, 64], sizes = [8, 32], strides = [1, 1]} : vector<8x128xf32> to vector<8x32xf32>
      %123 = math.tanh %122 : vector<8x32xf32>
      %124 = vector.extract_strided_slice %82 {offsets = [0, 96], sizes = [8, 32], strides = [1, 1]} : vector<8x128xf32> to vector<8x32xf32>
      %125 = arith.negf %124 : vector<8x32xf32>
      %126 = math.exp %125 : vector<8x32xf32>
      %cst_94 = arith.constant 1.000000e+00 : f32
      %127 = vector.broadcast %cst_94 : f32 to vector<8x32xf32>
      %128 = arith.addf %127, %126 : vector<8x32xf32>
      %129 = arith.divf %127, %128 : vector<8x32xf32>
      %130 = arith.mulf %121, %109 : vector<8x32xf32>
      %131 = arith.mulf %115, %123 : vector<8x32xf32>
      %132 = arith.addf %130, %131 : vector<8x32xf32>
      %133 = math.tanh %132 : vector<8x32xf32>
      %134 = arith.mulf %129, %133 : vector<8x32xf32>
      %135 = vector.broadcast %65 : i32 to vector<8x1xi32>
      %136 = arith.cmpi sgt, %0, %135 : vector<8x1xi32>
      %137 = vector.broadcast %67 : i32 to vector<8x1xi32>
      %138 = arith.cmpi sgt, %0, %137 : vector<8x1xi32>
      %139 = vector.extract_strided_slice %68 {offsets = [0, 0], sizes = [8, 32], strides = [1, 1]} : vector<8x64xf32> to vector<8x32xf32>
      %140 = vector.shape_cast %136 : vector<8x1xi1> to vector<8x1xi1>
      %141 = vector.broadcast %140 : vector<8x1xi1> to vector<8x32xi1>
      %142 = arith.select %141, %108, %139 : vector<8x32xi1>, vector<8x32xf32>
      %143 = vector.extract_strided_slice %69 {offsets = [0, 0], sizes = [8, 32], strides = [1, 1]} : vector<8x64xf32> to vector<8x32xf32>
      %144 = vector.shape_cast %136 : vector<8x1xi1> to vector<8x1xi1>
      %145 = vector.broadcast %144 : vector<8x1xi1> to vector<8x32xi1>
      %146 = arith.select %145, %106, %143 : vector<8x32xi1>, vector<8x32xf32>
      %147 = vector.extract_strided_slice %68 {offsets = [0, 32], sizes = [8, 32], strides = [1, 1]} : vector<8x64xf32> to vector<8x32xf32>
      %148 = vector.shape_cast %138 : vector<8x1xi1> to vector<8x1xi1>
      %149 = vector.broadcast %148 : vector<8x1xi1> to vector<8x32xi1>
      %150 = arith.select %149, %134, %147 : vector<8x32xi1>, vector<8x32xf32>
      %151 = vector.extract_strided_slice %69 {offsets = [0, 32], sizes = [8, 32], strides = [1, 1]} : vector<8x64xf32> to vector<8x32xf32>
      %152 = vector.shape_cast %138 : vector<8x1xi1> to vector<8x1xi1>
      %153 = vector.broadcast %152 : vector<8x1xi1> to vector<8x32xi1>
      %154 = arith.select %153, %132, %151 : vector<8x32xi1>, vector<8x32xf32>
      %155 = tpu.concatenate %142, %150 in 1 : vector<8x32xf32>, vector<8x32xf32> -> vector<8x64xf32>
      %c0_95 = arith.constant 0 : index
      %c0_96 = arith.constant 0 : index
      %156 = vector.load %arg17[%c0_95, %c0_96] : memref<8x64xf32, #tpu.memory_space<vmem>>, vector<8x64xf32>
      tpu.vector_store %arg17[%c0_95, %c0_96], %155 {strides = array<i32>} : memref<8x64xf32, #tpu.memory_space<vmem>>, vector<8x64xf32>,
      %157 = tpu.concatenate %146, %154 in 1 : vector<8x32xf32>, vector<8x32xf32> -> vector<8x64xf32>
      %c0_97 = arith.constant 0 : index
      %c0_98 = arith.constant 0 : index
      %158 = vector.load %arg18[%c0_97, %c0_98] : memref<8x64xf32, #tpu.memory_space<vmem>>, vector<8x64xf32>
      tpu.vector_store %arg18[%c0_97, %c0_98], %157 {strides = array<i32>} : memref<8x64xf32, #tpu.memory_space<vmem>>, vector<8x64xf32>,
    }
    %c0_65 = arith.constant 0 : index
    %c0_66 = arith.constant 0 : index
    %52 = vector.load %arg17[%c0_65, %c0_66] : memref<8x64xf32, #tpu.memory_space<vmem>>, vector<8x64xf32>
    %c0_67 = arith.constant 0 : index
    %c0_68 = arith.constant 0 : index
    %53 = vector.load %arg9[%c0_67, %c0_68] : memref<64x32xf32, #tpu.memory_space<vmem>>, vector<64x32xf32>
    %cst_69 = arith.constant dense<0.000000e+00> : vector<8x32xf32>
    %54 = tpu.matmul %52, %53, %cst_69 {dimension_numbers = #tpu.dot_dimension_numbers<[1], [0], [0], [1], [0, 0, 1, 1], [], []>} : vector<8x64xf32>, vector<64x32xf32>, vector<8x32xf32> -> vector<8x32xf32>
    %c0_70 = arith.constant 0 : index
    %c0_71 = arith.constant 0 : index
    %55 = vector.load %arg10[%c0_70, %c0_71] : memref<1x32xf32, #tpu.memory_space<vmem>>, vector<1x32xf32>
    %56 = vector.broadcast %55 : vector<1x32xf32> to vector<8x32xf32>
    %57 = arith.addf %54, %56 : vector<8x32xf32>
    %c0_72 = arith.constant 0 : index
    %c0_73 = arith.constant 0 : index
    %58 = vector.load %arg11[%c0_72, %c0_73] : memref<32x1xf32, #tpu.memory_space<vmem>>, vector<32x1xf32>
    %cst_74 = arith.constant dense<0.000000e+00> : vector<8x1xf32>
    %59 = tpu.matmul %57, %58, %cst_74 {dimension_numbers = #tpu.dot_dimension_numbers<[1], [0], [0], [1], [0, 0, 1, 1], [], []>} : vector<8x32xf32>, vector<32x1xf32>, vector<8x1xf32> -> vector<8x1xf32>
    %c0_75 = arith.constant 0 : index
    %c0_76 = arith.constant 0 : index
    %60 = vector.load %arg12[%c0_75, %c0_76] : memref<1x1xf32, #tpu.memory_space<vmem>>, vector<1x1xf32>
    %61 = vector.broadcast %60 : vector<1x1xf32> to vector<8x1xf32>
    %62 = arith.addf %59, %61 : vector<8x1xf32>
    %c0_77 = arith.constant 0 : index
    %c0_78 = arith.constant 0 : index
    %63 = vector.load %arg13[%c0_77, %c0_78] : memref<8x1xf32, #tpu.memory_space<vmem>>, vector<8x1xf32>
    tpu.vector_store %arg13[%c0_77, %c0_78], %62 {strides = array<i32>} : memref<8x1xf32, #tpu.memory_space<vmem>>, vector<8x1xf32>,
    return
  }
}

</mosaic_0001>

<llo_original>
// kernel: lstm_net_forward.1
$region0: #{lstm_net_forward.1}
  #allocation0 [shape = 'u32[]', space=smem, size = 0x4, offset = 0x4, fixed_abs, tag = 'smem constant byte address 0x4 - core index']
  #allocation1 [shape = 'u32[144,128]{1,0:T(1,128)}', space=vmem, size = 0x12000, scoped, tag = 'internal scratch']
  #allocation2 [shape = 'f32[8,8,256]{2,1,0:T(8,128)}', space=vmem, size = 0x10000, scoped, tag = 'scratch operand']
  #allocation3 [shape = 'f32[8,8,32]{2,1,0:T(8,128)}', space=vmem, size = 0x8000, scoped, tag = 'scratch operand']
  #allocation4 [shape = 'f32[8,8,32]{2,1,0:T(8,128)}', space=vmem, size = 0x8000, scoped, tag = 'scratch operand']
  #allocation5 [shape = 'f32[8,64]{1,0:T(8,128)}', space=vmem, size = 0x1000, scoped, tag = 'scratch operand']
  #allocation6 [shape = 'f32[8,64]{1,0:T(8,128)}', space=vmem, size = 0x1000, scoped, tag = 'scratch operand']
  #allocation7 [shape = 's32[1]{0:T(128)S(6)}', space=smem, size = 0x200, scoped, tag = 'scoped memory for lstm_net_forward.1']
  #allocation8 [shape = 'f32[1,1]{1,0:T(1,128)S(1)}', space=vmem, size = 0x200, scoped, tag = 'scoped memory for lstm_net_forward.1']
  %s0 = inlined_call_operand.vmem [shape: s32[8,1], index: 0, kind: input, shape index: {}]
  %s1 = inlined_call_operand.<no memory space> [shape: s32[1], index: 1, kind: input, shape index: {}]
  %s2 = inlined_call_operand.vmem [shape: f32[8,8,32], index: 2, kind: input, shape index: {}]
  %s3 = inlined_call_operand.vmem [shape: f32[32,256], index: 3, kind: input, shape index: {}]
  %s4 = inlined_call_operand.vmem [shape: f32[64,256], index: 4, kind: input, shape index: {}]
  %s5 = inlined_call_operand.vmem [shape: f32[1,256], index: 5, kind: input, shape index: {}]
  %s6 = inlined_call_operand.vmem [shape: f32[64,256], index: 6, kind: input, shape index: {}]
  %s7 = inlined_call_operand.vmem [shape: f32[64,256], index: 7, kind: input, shape index: {}]
  %s8 = inlined_call_operand.vmem [shape: f32[1,256], index: 8, kind: input, shape index: {}]
  %s9 = inlined_call_operand.vmem [shape: f32[64,32], index: 9, kind: input, shape index: {}]
  %s10 = inlined_call_operand.vmem [shape: f32[1,32], index: 10, kind: input, shape index: {}]
  %s11 = inlined_call_operand.vmem [shape: f32[32,1], index: 11, kind: input, shape index: {}]
  %s12 = inlined_call_operand.<no memory space> [shape: f32[1,1], index: 12, kind: input, shape index: {}]
  %s13 = inlined_call_operand.vmem [shape: f32[8,1], index: 13, kind: output, shape index: {}]
  %s14 = sld [smem:[#allocation0]]
  $region76: #{lstm_net_forward.1} parent=0
    _
  %s16 = ssub.s32 1, %s14
  %s17 = scalar_select 0, %s16, %s14
  %18 = sst [smem:[#allocation7]] %s1
  %v19 = vstv %s12
  %20 = vst [vmem:[#allocation8] sm:$0x1] %v19
  // Predicated region
  $region2: #{lstm_net_forward.1} parent=0 // pred_check
    _
  $region3: #{lstm_net_forward.1} parent=0 // pred_check_branch
    %22 = sbr.rel (0) target = $region5
  $region4: #{lstm_net_forward.1} parent=0 // pred_region
    _
  $region5: #{lstm_net_forward.1} parent=0 // pred_fallthru
    _
  // Predicated region
  $region6: #{lstm_net_forward.1} parent=0 // pred_check
    _
  $region7: #{lstm_net_forward.1} parent=0 // pred_check_branch
    %24 = sbr.rel (0) target = $region9
  $region8: #{lstm_net_forward.1} parent=0 // pred_region
    _
  $region9: #{lstm_net_forward.1} parent=0 // pred_fallthru
    _
  // Predicated region
  $region10: #{lstm_net_forward.1} parent=0 // pred_check
    _
  $region11: #{lstm_net_forward.1} parent=0 // pred_check_branch
    %26 = sbr.rel (0) target = $region13
  $region12: #{lstm_net_forward.1} parent=0 // pred_region
    _
  $region13: #{lstm_net_forward.1} parent=0 // pred_fallthru
    _
  // Predicated region
  $region14: #{lstm_net_forward.1} parent=0 // pred_check
    _
  $region15: #{lstm_net_forward.1} parent=0 // pred_check_branch
    %28 = sbr.rel (0) target = $region17
  $region16: #{lstm_net_forward.1} parent=0 // pred_region
    _
  $region17: #{lstm_net_forward.1} parent=0 // pred_fallthru
    _
  // Predicated region
  $region18: #{lstm_net_forward.1} parent=0 // pred_check
    _
  $region19: #{lstm_net_forward.1} parent=0 // pred_check_branch
    %30 = sbr.rel (0) target = $region21
  $region20: #{lstm_net_forward.1} parent=0 // pred_region
    _
  $region21: #{lstm_net_forward.1} parent=0 // pred_fallthru
    _
  // Predicated region
  $region22: #{lstm_net_forward.1} parent=0 // pred_check
    _
  $region23: #{lstm_net_forward.1} parent=0 // pred_check_branch
    %32 = sbr.rel (0) target = $region25
  $region24: #{lstm_net_forward.1} parent=0 // pred_region
    _
  $region25: #{lstm_net_forward.1} parent=0 // pred_fallthru
    _
  // Predicated region
  $region26: #{lstm_net_forward.1} parent=0 // pred_check
    _
  $region27: #{lstm_net_forward.1} parent=0 // pred_check_branch
    %34 = sbr.rel (0) target = $region29
  $region28: #{lstm_net_forward.1} parent=0 // pred_region
    _
  $region29: #{lstm_net_forward.1} parent=0 // pred_fallthru
    _
  // Predicated region
  $region30: #{lstm_net_forward.1} parent=0 // pred_check
    _
  $region31: #{lstm_net_forward.1} parent=0 // pred_check_branch
    %36 = sbr.rel (0) target = $region33
  $region32: #{lstm_net_forward.1} parent=0 // pred_region
    _
  $region33: #{lstm_net_forward.1} parent=0 // pred_fallthru
    _
  // Predicated region
  $region34: #{lstm_net_forward.1} parent=0 // pred_check
    _
  $region35: #{lstm_net_forward.1} parent=0 // pred_check_branch
    %38 = sbr.rel (0) target = $region37
  $region36: #{lstm_net_forward.1} parent=0 // pred_region
    _
  $region37: #{lstm_net_forward.1} parent=0 // pred_fallthru
    _
  // Predicated region
  $region38: #{lstm_net_forward.1} parent=0 // pred_check
    _
  $region39: #{lstm_net_forward.1} parent=0 // pred_check_branch
    %40 = sbr.rel (0) target = $region41
  $region40: #{lstm_net_forward.1} parent=0 // pred_region
    _
  $region41: #{lstm_net_forward.1} parent=0 // pred_fallthru
    _
  // Predicated region
  $region42: #{lstm_net_forward.1} parent=0 // pred_check
    _
  $region43: #{lstm_net_forward.1} parent=0 // pred_check_branch
    %42 = sbr.rel (0) target = $region45
  $region44: #{lstm_net_forward.1} parent=0 // pred_region
    _
  $region45: #{lstm_net_forward.1} parent=0 // pred_fallthru
    _
  // Predicated region
  $region46: #{lstm_net_forward.1} parent=0 // pred_check
    _
  $region47: #{lstm_net_forward.1} parent=0 // pred_check_branch
    %44 = sbr.rel (0) target = $region49
  $region48: #{lstm_net_forward.1} parent=0 // pred_region
    _
  $region49: #{lstm_net_forward.1} parent=0 // pred_fallthru
    _
  // Predicated region
  $region50: #{lstm_net_forward.1} parent=0 // pred_check
    _
  $region51: #{lstm_net_forward.1} parent=0 // pred_check_branch
    %46 = sbr.rel (0) target = $region53
  $region52: #{lstm_net_forward.1} parent=0 // pred_region
    _
  $region53: #{lstm_net_forward.1} parent=0 // pred_fallthru
    _
  %v47 = vld [vmem:[%s0] sm:$0xff]
  %s48 = sld [smem:[#allocation7]]
  %vm49 = vcmask 261120
  %50 = vst.msk [vmem:[#allocation3] sm:$0xff] %vm49, 0.0
  %51 = vst.msk [vmem:[#allocation3 + $0x8] sm:$0xff] %vm49, 0.0
  %52 = vst.msk [vmem:[#allocation3 + $0x10] sm:$0xff] %vm49, 0.0
  %53 = vst.msk [vmem:[#allocation3 + $0x18] sm:$0xff] %vm49, 0.0
  %54 = vst.msk [vmem:[#allocation3 + $0x20] sm:$0xff] %vm49, 0.0
  %55 = vst.msk [vmem:[#allocation3 + $0x28] sm:$0xff] %vm49, 0.0
  %56 = vst.msk [vmem:[#allocation3 + $0x30] sm:$0xff] %vm49, 0.0
  %57 = vst.msk [vmem:[#allocation3 + $0x38] sm:$0xff] %vm49, 0.0
  %58 = vst.msk [vmem:[#allocation4] sm:$0xff] %vm49, 0.0
  %59 = vst.msk [vmem:[#allocation4 + $0x8] sm:$0xff] %vm49, 0.0
  %60 = vst.msk [vmem:[#allocation4 + $0x10] sm:$0xff] %vm49, 0.0
  %61 = vst.msk [vmem:[#allocation4 + $0x18] sm:$0xff] %vm49, 0.0
  %62 = vst.msk [vmem:[#allocation4 + $0x20] sm:$0xff] %vm49, 0.0
  %63 = vst.msk [vmem:[#allocation4 + $0x28] sm:$0xff] %vm49, 0.0
  %64 = vst.msk [vmem:[#allocation4 + $0x30] sm:$0xff] %vm49, 0.0
  %65 = vst.msk [vmem:[#allocation4 + $0x38] sm:$0xff] %vm49, 0.0
  %v66 = vld [vmem:[%s2] sm:$0xff]
  %v67 = vld [vmem:[%s2 + $0x8] sm:$0xff]
  %v68 = vld [vmem:[%s2 + $0x10] sm:$0xff]
  %v69 = vld [vmem:[%s2 + $0x18] sm:$0xff]
  %v70 = vld [vmem:[%s2 + $0x20] sm:$0xff]
  %v71 = vld [vmem:[%s2 + $0x28] sm:$0xff]
  %v72 = vld [vmem:[%s2 + $0x30] sm:$0xff]
  %v73 = vld [vmem:[%s2 + $0x38] sm:$0xff]
  %v74 = vld [vmem:[%s3] sm:$0xff]
  %v75 = vld [vmem:[%s3 + $0x8] sm:$0xff]
  %v76 = vld [vmem:[%s3 + $0x10] sm:$0xff]
  %v77 = vld [vmem:[%s3 + $0x18] sm:$0xff]
  %v78 = vld [vmem:[%s3 + $0x20] sm:$0xff]
  %v79 = vld [vmem:[%s3 + $0x28] sm:$0xff]
  %v80 = vld [vmem:[%s3 + $0x30] sm:$0xff]
  %v81 = vld [vmem:[%s3 + $0x38] sm:$0xff]
  %v82 = vld [vmem:[%s5] sm:$0x3]
  %v84 = vlaneseq
  %v85 = vshrl.u32 %v84, 7
  %v86 = vsub.s32 0, %v85
  %v87 = vrot.slane %v82, %v86
  %v88 = vlaneseq
  %v89 = vshrl.u32 %v88, 7
  %v90 = vsub.s32 1, %v89
  %v91 = vrot.slane %v82, %v90
  %v95 = vsel %vm49, %v66, 0
  %v98 = vsel %vm49, %v67, 0
  %v101 = vsel %vm49, %v68, 0
  %v104 = vsel %vm49, %v69, 0
  %v107 = vsel %vm49, %v70, 0
  %v110 = vsel %vm49, %v71, 0
  %v113 = vsel %vm49, %v72, 0
  %v116 = vsel %vm49, %v73, 0
  %118 = vmatprep.subr.mxu0 0.0
  %119 = vmatpush1.msra.mxu0 0.0
  %120 = vmatprep.subr.mxu0 0.0
  %121 = vmatpush1.msra.mxu0 0.0
  %122 = vmatprep.subr.mxu0 0.0
  %123 = vmatpush1.msra.mxu0 0.0
  %124 = vmatprep.subr.mxu0 0.0
  %125 = vmatpush1.msra.mxu0 0.0
  %126 = vmatprep.subr.mxu0 0.0
  %127 = vmatpush1.msra.mxu0 0.0
  %128 = vmatprep.subr.mxu0 0.0
  %129 = vmatpush1.msra.mxu0 0.0
  %130 = vmatprep.subr.mxu0 0.0
  %131 = vmatpush1.msra.mxu0 0.0
  %132 = vmatprep.subr.mxu0 0.0
  %133 = vmatpush1.msra.mxu0 0.0
  %134 = vmatprep.subr.mxu0 0.0
  %135 = vmatpush1.msra.mxu0 0.0
  %136 = vmatprep.subr.mxu0 0.0
  %137 = vmatpush1.msra.mxu0 0.0
  %138 = vmatprep.subr.mxu0 0.0
  %139 = vmatpush1.msra.mxu0 0.0
  %140 = vmatprep.subr.mxu0 0.0
  %141 = vmatpush1.msra.mxu0 0.0
  %142 = vmatprep.subr.mxu0 %v81
  %143 = vmatpush1.msra.mxu0 %v80
  %144 = vmatprep.subr.mxu0 %v79
  %145 = vmatpush1.msra.mxu0 %v78
  %146 = vmatprep.subr.mxu0 %v77
  %147 = vmatpush1.msra.mxu0 %v76
  %148 = vmatprep.subr.mxu0 %v75
  %149 = vmatpush1.msra.mxu0 %v74
  %150 = vmatprep.subr.mxu0 0.0
  %151 = vmatpush2.msra.mxu0 0.0
  %152 = vmatprep.subr.mxu0 0.0
  %153 = vmatpush2.msra.mxu0 0.0
  %154 = vmatprep.subr.mxu0 0.0
  %155 = vmatpush2.msra.mxu0 0.0
  %156 = vmatprep.subr.mxu0 0.0
  %157 = vmatpush2.msra.mxu0 0.0
  %158 = vmatprep.subr.mxu0 0.0
  %159 = vmatpush2.msra.mxu0 0.0
  %160 = vmatprep.subr.mxu0 0.0
  %161 = vmatpush2.msra.mxu0 0.0
  %162 = vmatprep.subr.mxu0 0.0
  %163 = vmatpush2.msra.mxu0 0.0
  %164 = vmatprep.subr.mxu0 0.0
  %165 = vmatpush2.msra.mxu0 0.0
  %166 = vmatprep.subr.mxu0 0.0
  %167 = vmatpush2.msra.mxu0 0.0
  %168 = vmatprep.subr.mxu0 0.0
  %169 = vmatpush2.msra.mxu0 0.0
  %170 = vmatprep.subr.mxu0 0.0
  %171 = vmatpush2.msra.mxu0 0.0
  %172 = vmatprep.subr.mxu0 0.0
  %173 = vmatpush2.msra.mxu0 0.0
  %174 = vmatprep.subr.mxu0 0.0
  %175 = vmatpush2.msra.mxu0 0.0
  %176 = vmatprep.subr.mxu0 0.0
  %177 = vmatpush2.msra.mxu0 0.0
  %178 = vmatprep.subr.mxu0 0.0
  %179 = vmatpush2.msra.mxu0 0.0
  %180 = vmatprep.subr.mxu0 0.0
  %181 = vmatpush2.msra.mxu0 0.0
  %182 = vmatprep.mubr.f32.mxu0 0.0
  %183 = vmatmul.mubr.f32.gmra.mxu0 %v95
  %v184 = vpop.f32.mrf.mxu0
  %v185 = vadd.f32 %v87, %v184
  %v186 = vpop.f32.mrf.mxu0
  %v187 = vadd.f32 %v91, %v186
  %188 = vmatprep.mubr.f32.mxu0 0.0
  %189 = vmatmul.mubr.f32.gmra.mxu0 %v98
  %v190 = vpop.f32.mrf.mxu0
  %v191 = vadd.f32 %v87, %v190
  %v192 = vpop.f32.mrf.mxu0
  %v193 = vadd.f32 %v91, %v192
  %194 = vmatprep.mubr.f32.mxu0 0.0
  %195 = vmatmul.mubr.f32.gmra.mxu0 %v101
  %v196 = vpop.f32.mrf.mxu0
  %v197 = vadd.f32 %v87, %v196
  %v198 = vpop.f32.mrf.mxu0
  %v199 = vadd.f32 %v91, %v198
  %200 = vmatprep.mubr.f32.mxu0 0.0
  %201 = vmatmul.mubr.f32.gmra.mxu0 %v104
  %v202 = vpop.f32.mrf.mxu0
  %v203 = vadd.f32 %v87, %v202
  %v204 = vpop.f32.mrf.mxu0
  %v205 = vadd.f32 %v91, %v204
  %206 = vmatprep.mubr.f32.mxu0 0.0
  %207 = vmatmul.mubr.f32.gmra.mxu0 %v107
  %v208 = vpop.f32.mrf.mxu0
  %v209 = vadd.f32 %v87, %v208
  %v210 = vpop.f32.mrf.mxu0
  %v211 = vadd.f32 %v91, %v210
  %212 = vmatprep.mubr.f32.mxu0 0.0
  %213 = vmatmul.mubr.f32.gmra.mxu0 %v110
  %v214 = vpop.f32.mrf.mxu0
  %v215 = vadd.f32 %v87, %v214
  %v216 = vpop.f32.mrf.mxu0
  %v217 = vadd.f32 %v91, %v216
  %218 = vmatprep.mubr.f32.mxu0 0.0
  %219 = vmatmul.mubr.f32.gmra.mxu0 %v113
  %v220 = vpop.f32.mrf.mxu0
  %v221 = vadd.f32 %v87, %v220
  %v222 = vpop.f32.mrf.mxu0
  %v223 = vadd.f32 %v91, %v222
  %224 = vmatprep.mubr.f32.mxu0 0.0
  %225 = vmatmul.mubr.f32.gmra.mxu0 %v116
  %v226 = vpop.f32.mrf.mxu0
  %v227 = vadd.f32 %v87, %v226
  %v228 = vpop.f32.mrf.mxu0
  %v229 = vadd.f32 %v91, %v228
  %230 = vdwg.mxu0
  %231 = vst [vmem:[#allocation2] sm:$0xff] %v185
  %232 = vst [vmem:[#allocation2 + $0x8] sm:$0xff] %v187
  %233 = vst [vmem:[#allocation2 + $0x10] sm:$0xff] %v191
  %234 = vst [vmem:[#allocation2 + $0x18] sm:$0xff] %v193
  %235 = vst [vmem:[#allocation2 + $0x20] sm:$0xff] %v197
  %236 = vst [vmem:[#allocation2 + $0x28] sm:$0xff] %v199
  %237 = vst [vmem:[#allocation2 + $0x30] sm:$0xff] %v203
  %238 = vst [vmem:[#allocation2 + $0x38] sm:$0xff] %v205
  %239 = vst [vmem:[#allocation2 + $0x40] sm:$0xff] %v209
  %240 = vst [vmem:[#allocation2 + $0x48] sm:$0xff] %v211
  %241 = vst [vmem:[#allocation2 + $0x50] sm:$0xff] %v215
  %242 = vst [vmem:[#allocation2 + $0x58] sm:$0xff] %v217
  %243 = vst [vmem:[#allocation2 + $0x60] sm:$0xff] %v221
  %244 = vst [vmem:[#allocation2 + $0x68] sm:$0xff] %v223
  %245 = vst [vmem:[#allocation2 + $0x70] sm:$0xff] %v227
  %246 = vst [vmem:[#allocation2 + $0x78] sm:$0xff] %v229
  %vm247 = vcmask 523264
  %248 = vst.msk [vmem:[#allocation5] sm:$0xff] %vm247, 0.0
  %249 = vst.msk [vmem:[#allocation6] sm:$0xff] %vm247, 0.0
  %v250 = vld [vmem:[%s4] sm:$0xff]
  %v251 = vld [vmem:[%s4 + $0x8] sm:$0xff]
  %v252 = vld [vmem:[%s4 + $0x10] sm:$0xff]
  %v253 = vld [vmem:[%s4 + $0x18] sm:$0xff]
  %v254 = vld [vmem:[%s4 + $0x20] sm:$0xff]
  %v255 = vld [vmem:[%s4 + $0x28] sm:$0xff]
  %v256 = vld [vmem:[%s4 + $0x30] sm:$0xff]
  %v257 = vld [vmem:[%s4 + $0x38] sm:$0xff]
  %v258 = vld [vmem:[%s4 + $0x40] sm:$0xff]
  %v259 = vld [vmem:[%s4 + $0x48] sm:$0xff]
  %v260 = vld [vmem:[%s4 + $0x50] sm:$0xff]
  %v261 = vld [vmem:[%s4 + $0x58] sm:$0xff]
  %v262 = vld [vmem:[%s4 + $0x60] sm:$0xff]
  %v263 = vld [vmem:[%s4 + $0x68] sm:$0xff]
  %v264 = vld [vmem:[%s4 + $0x70] sm:$0xff]
  %v265 = vld [vmem:[%s4 + $0x78] sm:$0xff]
  // While loop
  $region54: #{lstm_net_forward.1} parent=0 // loop_pre_header
    _
  $region55: #{lstm_net_forward.1} parent=0 // loop_header
    %s267 = sphi 0, %s269
    %p268 = scmp.ge.s32.totalorder %s267, %s48
  $region56: #{lstm_net_forward.1} parent=0 // loop_header_branch
    %271 = sbr.rel (%p268) target = $region60
  $region57: #{lstm_net_forward.1} parent=0 // loop_body
    %s272 = ssub.s32 %s48, 1
    %s273 = ssub.s32 %s272, %s267
    %v274 = vld [vmem:[#allocation5] sm:$0xff]
    %v275 = vld [vmem:[#allocation6] sm:$0xff]
    %v277 = vsel %vm247, %v274, 0
    %279 = vmatprep.subr.mxu0 0.0
    %280 = vmatpush1.msra.mxu0 0.0
    %281 = vmatprep.subr.mxu0 0.0
    %282 = vmatpush1.msra.mxu0 0.0
    %283 = vmatprep.subr.mxu0 0.0
    %284 = vmatpush1.msra.mxu0 0.0
    %285 = vmatprep.subr.mxu0 0.0
    %286 = vmatpush1.msra.mxu0 0.0
    %287 = vmatprep.subr.mxu0 0.0
    %288 = vmatpush1.msra.mxu0 0.0
    %289 = vmatprep.subr.mxu0 0.0
    %290 = vmatpush1.msra.mxu0 0.0
    %291 = vmatprep.subr.mxu0 0.0
    %292 = vmatpush1.msra.mxu0 0.0
    %293 = vmatprep.subr.mxu0 0.0
    %294 = vmatpush1.msra.mxu0 0.0
    %295 = vmatprep.subr.mxu0 %v265
    %296 = vmatpush1.msra.mxu0 %v264
    %297 = vmatprep.subr.mxu0 %v263
    %298 = vmatpush1.msra.mxu0 %v262
    %299 = vmatprep.subr.mxu0 %v261
    %300 = vmatpush1.msra.mxu0 %v260
    %301 = vmatprep.subr.mxu0 %v259
    %302 = vmatpush1.msra.mxu0 %v258
    %303 = vmatprep.subr.mxu0 %v257
    %304 = vmatpush1.msra.mxu0 %v256
    %305 = vmatprep.subr.mxu0 %v255
    %306 = vmatpush1.msra.mxu0 %v254
    %307 = vmatprep.subr.mxu0 %v253
    %308 = vmatpush1.msra.mxu0 %v252
    %309 = vmatprep.subr.mxu0 %v251
    %310 = vmatpush1.msra.mxu0 %v250
    %311 = vmatprep.subr.mxu0 0.0
    %312 = vmatpush2.msra.mxu0 0.0
    %313 = vmatprep.subr.mxu0 0.0
    %314 = vmatpush2.msra.mxu0 0.0
    %315 = vmatprep.subr.mxu0 0.0
    %316 = vmatpush2.msra.mxu0 0.0
    %317 = vmatprep.subr.mxu0 0.0
    %318 = vmatpush2.msra.mxu0 0.0
    %319 = vmatprep.subr.mxu0 0.0
    %320 = vmatpush2.msra.mxu0 0.0
    %321 = vmatprep.subr.mxu0 0.0
    %322 = vmatpush2.msra.mxu0 0.0
    %323 = vmatprep.subr.mxu0 0.0
    %324 = vmatpush2.msra.mxu0 0.0
    %325 = vmatprep.subr.mxu0 0.0
    %326 = vmatpush2.msra.mxu0 0.0
    %327 = vmatprep.subr.mxu0 0.0
    %328 = vmatpush2.msra.mxu0 0.0
    %329 = vmatprep.subr.mxu0 0.0
    %330 = vmatpush2.msra.mxu0 0.0
    %331 = vmatprep.subr.mxu0 0.0
    %332 = vmatpush2.msra.mxu0 0.0
    %333 = vmatprep.subr.mxu0 0.0
    %334 = vmatpush2.msra.mxu0 0.0
    %335 = vmatprep.subr.mxu0 0.0
    %336 = vmatpush2.msra.mxu0 0.0
    %337 = vmatprep.subr.mxu0 0.0
    %338 = vmatpush2.msra.mxu0 0.0
    %339 = vmatprep.subr.mxu0 0.0
    %340 = vmatpush2.msra.mxu0 0.0
    %341 = vmatprep.subr.mxu0 0.0
    %342 = vmatpush2.msra.mxu0 0.0
    %343 = vmatprep.mubr.f32.mxu0 0.0
    %344 = vmatmul.mubr.f32.gmra.mxu0 %v277
    %v345 = vpop.f32.mrf.mxu0
    %v346 = vadd.f32 0.0, %v345
    %v347 = vpop.f32.mrf.mxu0
    %v348 = vadd.f32 0.0, %v347
    %349 = vdwg.mxu0
    %s350 = smul.u32 %s267, 2
    %s351 = smul.addr %s350, 8
    %s352 = scalar_lea.vmem [#allocation2], %s351
    %v353 = vld [vmem:[%s352] sm:$0xff]
    %v354 = vadd.f32 %v346, %v353
    %s355 = smul.u32 %s273, 2
    %s356 = smul.addr %s355, 8
    %s357 = scalar_lea.vmem [#allocation2], %s356
    %v358 = vld [vmem:[%s357 + $0x8] sm:$0xff]
    %v359 = vadd.f32 %v348, %v358
    %v360 = vxor.u32 %v354, 2147483648
    %v361 = vmul.f32 %v360, 1.442695
    %v362 = vpow.pop %v361
    %v363 = vadd.f32 %v362, 1.0
    %v364 = vrcp.pop %v363
    %v365 = vmul.f32 1.0, %v364
    %v366 = vtanh.pop %v354
    %368 = vrot.lane.b32.xlu0 %v275, 32
    %v369 = vpop.permute.xlu0 %368
    %v371 = vmul.f32 %v365, %v369
    %373 = vrot.lane.b32.xlu0 %v366, 64
    %v374 = vpop.permute.xlu0 %373
    %v376 = vmul.f32 %v365, %v374
    %378 = vrot.lane.b32.xlu0 %v376, 32
    %v379 = vpop.permute.xlu0 %378
    %v381 = vadd.f32 %v371, %v379
    %v382 = vtanh.pop %v381
    %384 = vrot.lane.b32.xlu0 %v382, 64
    %v385 = vpop.permute.xlu0 %384
    %v387 = vmul.f32 %v365, %v385
    %v388 = vxor.u32 %v359, 2147483648
    %v389 = vmul.f32 %v388, 1.442695
    %v390 = vpow.pop %v389
    %v391 = vadd.f32 %v390, 1.0
    %v392 = vrcp.pop %v391
    %v393 = vmul.f32 1.0, %v392
    %v394 = vtanh.pop %v359
    %v395 = vmul.f32 %v393, %v275
    %397 = vrot.lane.b32.xlu0 %v394, 64
    %v398 = vpop.permute.xlu0 %397
    %v400 = vmul.f32 %v393, %v398
    %402 = vrot.lane.b32.xlu0 %v400, 32
    %v403 = vpop.permute.xlu0 %402
    %v405 = vadd.f32 %v395, %v403
    %v406 = vtanh.pop %v405
    %408 = vrot.lane.b32.xlu0 %v406, 64
    %v409 = vpop.permute.xlu0 %408
    %v411 = vmul.f32 %v393, %v409
    %v412 = vstv %s267
    %vm413 = vcmp.gt.s32.totalorder %v47, %v412
    %v414 = vstv %s273
    %vm415 = vcmp.gt.s32.totalorder %v47, %v414
    %v416 = vsel %vm413, 1, 0
    %417 = vset.pattern.permute.xlu0 0
    %418 = vperm.xlu0 %417, %v416
    %v419 = vpop.permute.xlu0 %418
    %vm420 = vcmp.eq.s32.totalorder %v419, 1
    %421 = vrot.lane.b32.xlu0 %v274, 96
    %v422 = vpop.permute.xlu0 %421
    %v424 = vsel %vm420, %v387, %v422
    %v425 = vsel %vm420, %v381, %v369
    %v426 = vsel %vm415, 1, 0
    %427 = vset.pattern.permute.xlu0 0
    %428 = vperm.xlu0 %427, %v426
    %v429 = vpop.permute.xlu0 %428
    %vm430 = vcmp.eq.s32.totalorder %v429, 1
    %431 = vrot.lane.b32.xlu0 %v274, 64
    %v432 = vpop.permute.xlu0 %431
    %v434 = vsel %vm430, %v411, %v432
    %v435 = vsel %vm430, %v405, %v275
    %437 = vrot.lane.b32.xlu0 %v424, 32
    %v438 = vpop.permute.xlu0 %437
    %441 = vrot.lane.b32.xlu0 %v434, 64
    %v442 = vpop.permute.xlu0 %441
    %v444 = vsel %vm49, %v438, %v442
    %445 = vst.msk [vmem:[#allocation5] sm:$0xff] %vm247, %v444
    %447 = vrot.lane.b32.xlu0 %v425, 96
    %v448 = vpop.permute.xlu0 %447
    %v450 = vsel %vm49, %v448, %v435
    %451 = vst.msk [vmem:[#allocation6] sm:$0xff] %vm247, %v450
    %v452 = vsel %vm420, %v387, 0.0
    %454 = vrot.lane.b32.xlu0 %v452, 32
    %v455 = vpop.permute.xlu0 %454
    %s457 = smul.u32 %s267, 8
    %s458 = scalar_lea.vmem [#allocation3], %s457
    %459 = vst.msk [vmem:[%s458] sm:$0xff] %vm49, %v455
    %v460 = vsel %vm430, %v411, 0.0
    %462 = vrot.lane.b32.xlu0 %v460, 32
    %v463 = vpop.permute.xlu0 %462
    %s465 = smul.u32 %s273, 8
    %s466 = scalar_lea.vmem [#allocation4], %s465
    %467 = vst.msk [vmem:[%s466] sm:$0xff] %vm49, %v463
  $region58: #{lstm_net_forward.1} parent=0 // loop_footer
    %s269 = sadd.s32 %s267, 1
  $region59: #{lstm_net_forward.1} parent=0 // loop_footer_branch
    %266 = sbr.rel target = $region55
  $region60: #{lstm_net_forward.1} parent=0 // loop_exit
    _
  %v468 = vld [vmem:[#allocation3] sm:$0xff]
  %v469 = vld [vmem:[#allocation3 + $0x8] sm:$0xff]
  %v470 = vld [vmem:[#allocation3 + $0x10] sm:$0xff]
  %v471 = vld [vmem:[#allocation3 + $0x18] sm:$0xff]
  %v472 = vld [vmem:[#allocation3 + $0x20] sm:$0xff]
  %v473 = vld [vmem:[#allocation3 + $0x28] sm:$0xff]
  %v474 = vld [vmem:[#allocation3 + $0x30] sm:$0xff]
  %v475 = vld [vmem:[#allocation3 + $0x38] sm:$0xff]
  %v476 = vld [vmem:[#allocation4] sm:$0xff]
  %v477 = vld [vmem:[#allocation4 + $0x8] sm:$0xff]
  %v478 = vld [vmem:[#allocation4 + $0x10] sm:$0xff]
  %v479 = vld [vmem:[#allocation4 + $0x18] sm:$0xff]
  %v480 = vld [vmem:[#allocation4 + $0x20] sm:$0xff]
  %v481 = vld [vmem:[#allocation4 + $0x28] sm:$0xff]
  %v482 = vld [vmem:[#allocation4 + $0x30] sm:$0xff]
  %v483 = vld [vmem:[#allocation4 + $0x38] sm:$0xff]
  %v484 = vld [vmem:[%s6] sm:$0xff]
  %v485 = vld [vmem:[%s6 + $0x8] sm:$0xff]
  %v486 = vld [vmem:[%s6 + $0x10] sm:$0xff]
  %v487 = vld [vmem:[%s6 + $0x18] sm:$0xff]
  %v488 = vld [vmem:[%s6 + $0x20] sm:$0xff]
  %v489 = vld [vmem:[%s6 + $0x28] sm:$0xff]
  %v490 = vld [vmem:[%s6 + $0x30] sm:$0xff]
  %v491 = vld [vmem:[%s6 + $0x38] sm:$0xff]
  %v492 = vld [vmem:[%s6 + $0x40] sm:$0xff]
  %v493 = vld [vmem:[%s6 + $0x48] sm:$0xff]
  %v494 = vld [vmem:[%s6 + $0x50] sm:$0xff]
  %v495 = vld [vmem:[%s6 + $0x58] sm:$0xff]
  %v496 = vld [vmem:[%s6 + $0x60] sm:$0xff]
  %v497 = vld [vmem:[%s6 + $0x68] sm:$0xff]
  %v498 = vld [vmem:[%s6 + $0x70] sm:$0xff]
  %v499 = vld [vmem:[%s6 + $0x78] sm:$0xff]
  %v501 = vsel %vm49, %v476, 0
  %v504 = vsel %vm49, %v477, 0
  %v507 = vsel %vm49, %v478, 0
  %v510 = vsel %vm49, %v479, 0
  %v513 = vsel %vm49, %v480, 0
  %v516 = vsel %vm49, %v481, 0
  %v519 = vsel %vm49, %v482, 0
  %v522 = vsel %vm49, %v483, 0
  %524 = vmatprep.subr.mxu0 0.0
  %525 = vmatpush1.msra.mxu0 0.0
  %526 = vmatprep.subr.mxu0 0.0
  %527 = vmatpush1.msra.mxu0 0.0
  %528 = vmatprep.subr.mxu0 0.0
  %529 = vmatpush1.msra.mxu0 0.0
  %530 = vmatprep.subr.mxu0 0.0
  %531 = vmatpush1.msra.mxu0 0.0
  %532 = vmatprep.subr.mxu0 0.0
  %533 = vmatpush1.msra.mxu0 0.0
  %534 = vmatprep.subr.mxu0 0.0
  %535 = vmatpush1.msra.mxu0 0.0
  %536 = vmatprep.subr.mxu0 0.0
  %537 = vmatpush1.msra.mxu0 0.0
  %538 = vmatprep.subr.mxu0 0.0
  %539 = vmatpush1.msra.mxu0 0.0
  %540 = vmatprep.subr.mxu0 0.0
  %541 = vmatpush1.msra.mxu0 0.0
  %542 = vmatprep.subr.mxu0 0.0
  %543 = vmatpush1.msra.mxu0 0.0
  %544 = vmatprep.subr.mxu0 0.0
  %545 = vmatpush1.msra.mxu0 0.0
  %546 = vmatprep.subr.mxu0 0.0
  %547 = vmatpush1.msra.mxu0 0.0
  %548 = vmatprep.subr.mxu0 %v499
  %549 = vmatpush1.msra.mxu0 %v498
  %550 = vmatprep.subr.mxu0 %v497
  %551 = vmatpush1.msra.mxu0 %v496
  %552 = vmatprep.subr.mxu0 %v495
  %553 = vmatpush1.msra.mxu0 %v494
  %554 = vmatprep.subr.mxu0 %v493
  %555 = vmatpush1.msra.mxu0 %v492
  %556 = vmatprep.subr.mxu0 0.0
  %557 = vmatpush2.msra.mxu0 0.0
  %558 = vmatprep.subr.mxu0 0.0
  %559 = vmatpush2.msra.mxu0 0.0
  %560 = vmatprep.subr.mxu0 0.0
  %561 = vmatpush2.msra.mxu0 0.0
  %562 = vmatprep.subr.mxu0 0.0
  %563 = vmatpush2.msra.mxu0 0.0
  %564 = vmatprep.subr.mxu0 0.0
  %565 = vmatpush2.msra.mxu0 0.0
  %566 = vmatprep.subr.mxu0 0.0
  %567 = vmatpush2.msra.mxu0 0.0
  %568 = vmatprep.subr.mxu0 0.0
  %569 = vmatpush2.msra.mxu0 0.0
  %570 = vmatprep.subr.mxu0 0.0
  %571 = vmatpush2.msra.mxu0 0.0
  %572 = vmatprep.subr.mxu0 0.0
  %573 = vmatpush2.msra.mxu0 0.0
  %574 = vmatprep.subr.mxu0 0.0
  %575 = vmatpush2.msra.mxu0 0.0
  %576 = vmatprep.subr.mxu0 0.0
  %577 = vmatpush2.msra.mxu0 0.0
  %578 = vmatprep.subr.mxu0 0.0
  %579 = vmatpush2.msra.mxu0 0.0
  %580 = vmatprep.subr.mxu0 0.0
  %581 = vmatpush2.msra.mxu0 0.0
  %582 = vmatprep.subr.mxu0 0.0
  %583 = vmatpush2.msra.mxu0 0.0
  %584 = vmatprep.subr.mxu0 0.0
  %585 = vmatpush2.msra.mxu0 0.0
  %586 = vmatprep.subr.mxu0 0.0
  %587 = vmatpush2.msra.mxu0 0.0
  %588 = vmatprep.mubr.f32.mxu0 0.0
  %589 = vmatmul.mubr.f32.gmra.mxu0 %v501
  %v590 = vpop.f32.mrf.mxu0
  %v591 = vadd.f32 0.0, %v590
  %v592 = vpop.f32.mrf.mxu0
  %v593 = vadd.f32 0.0, %v592
  %594 = vmatprep.mubr.f32.mxu0 0.0
  %595 = vmatmul.mubr.f32.gmra.mxu0 %v504
  %v596 = vpop.f32.mrf.mxu0
  %v597 = vadd.f32 0.0, %v596
  %v598 = vpop.f32.mrf.mxu0
  %v599 = vadd.f32 0.0, %v598
  %600 = vmatprep.mubr.f32.mxu0 0.0
  %601 = vmatmul.mubr.f32.gmra.mxu0 %v507
  %v602 = vpop.f32.mrf.mxu0
  %v603 = vadd.f32 0.0, %v602
  %v604 = vpop.f32.mrf.mxu0
  %v605 = vadd.f32 0.0, %v604
  %606 = vmatprep.mubr.f32.mxu0 0.0
  %607 = vmatmul.mubr.f32.gmra.mxu0 %v510
  %v608 = vpop.f32.mrf.mxu0
  %v609 = vadd.f32 0.0, %v608
  %v610 = vpop.f32.mrf.mxu0
  %v611 = vadd.f32 0.0, %v610
  %612 = vmatprep.mubr.f32.mxu0 0.0
  %613 = vmatmul.mubr.f32.gmra.mxu0 %v513
  %v614 = vpop.f32.mrf.mxu0
  %v615 = vadd.f32 0.0, %v614
  %v616 = vpop.f32.mrf.mxu0
  %v617 = vadd.f32 0.0, %v616
  %618 = vmatprep.mubr.f32.mxu0 0.0
  %619 = vmatmul.mubr.f32.gmra.mxu0 %v516
  %v620 = vpop.f32.mrf.mxu0
  %v621 = vadd.f32 0.0, %v620
  %v622 = vpop.f32.mrf.mxu0
  %v623 = vadd.f32 0.0, %v622
  %624 = vmatprep.mubr.f32.mxu0 0.0
  %625 = vmatmul.mubr.f32.gmra.mxu0 %v519
  %v626 = vpop.f32.mrf.mxu0
  %v627 = vadd.f32 0.0, %v626
  %v628 = vpop.f32.mrf.mxu0
  %v629 = vadd.f32 0.0, %v628
  %630 = vmatprep.mubr.f32.mxu0 0.0
  %631 = vmatmul.mubr.f32.gmra.mxu0 %v522
  %v632 = vpop.f32.mrf.mxu0
  %v633 = vadd.f32 0.0, %v632
  %v634 = vpop.f32.mrf.mxu0
  %v635 = vadd.f32 0.0, %v634
  %636 = vdwg.mxu0
  %v638 = vsel %vm49, %v468, 0
  %v641 = vsel %vm49, %v469, 0
  %v644 = vsel %vm49, %v470, 0
  %v647 = vsel %vm49, %v471, 0
  %v650 = vsel %vm49, %v472, 0
  %v653 = vsel %vm49, %v473, 0
  %v656 = vsel %vm49, %v474, 0
  %v659 = vsel %vm49, %v475, 0
  %661 = vmatprep.subr.mxu0 0.0
  %662 = vmatpush1.msra.mxu0 0.0
  %663 = vmatprep.subr.mxu0 0.0
  %664 = vmatpush1.msra.mxu0 0.0
  %665 = vmatprep.subr.mxu0 0.0
  %666 = vmatpush1.msra.mxu0 0.0
  %667 = vmatprep.subr.mxu0 0.0
  %668 = vmatpush1.msra.mxu0 0.0
  %669 = vmatprep.subr.mxu0 0.0
  %670 = vmatpush1.msra.mxu0 0.0
  %671 = vmatprep.subr.mxu0 0.0
  %672 = vmatpush1.msra.mxu0 0.0
  %673 = vmatprep.subr.mxu0 0.0
  %674 = vmatpush1.msra.mxu0 0.0
  %675 = vmatprep.subr.mxu0 0.0
  %676 = vmatpush1.msra.mxu0 0.0
  %677 = vmatprep.subr.mxu0 0.0
  %678 = vmatpush1.msra.mxu0 0.0
  %679 = vmatprep.subr.mxu0 0.0
  %680 = vmatpush1.msra.mxu0 0.0
  %681 = vmatprep.subr.mxu0 0.0
  %682 = vmatpush1.msra.mxu0 0.0
  %683 = vmatprep.subr.mxu0 0.0
  %684 = vmatpush1.msra.mxu0 0.0
  %685 = vmatprep.subr.mxu0 %v491
  %686 = vmatpush1.msra.mxu0 %v490
  %687 = vmatprep.subr.mxu0 %v489
  %688 = vmatpush1.msra.mxu0 %v488
  %689 = vmatprep.subr.mxu0 %v487
  %690 = vmatpush1.msra.mxu0 %v486
  %691 = vmatprep.subr.mxu0 %v485
  %692 = vmatpush1.msra.mxu0 %v484
  %693 = vmatprep.subr.mxu0 0.0
  %694 = vmatpush2.msra.mxu0 0.0
  %695 = vmatprep.subr.mxu0 0.0
  %696 = vmatpush2.msra.mxu0 0.0
  %697 = vmatprep.subr.mxu0 0.0
  %698 = vmatpush2.msra.mxu0 0.0
  %699 = vmatprep.subr.mxu0 0.0
  %700 = vmatpush2.msra.mxu0 0.0
  %701 = vmatprep.subr.mxu0 0.0
  %702 = vmatpush2.msra.mxu0 0.0
  %703 = vmatprep.subr.mxu0 0.0
  %704 = vmatpush2.msra.mxu0 0.0
  %705 = vmatprep.subr.mxu0 0.0
  %706 = vmatpush2.msra.mxu0 0.0
  %707 = vmatprep.subr.mxu0 0.0
  %708 = vmatpush2.msra.mxu0 0.0
  %709 = vmatprep.subr.mxu0 0.0
  %710 = vmatpush2.msra.mxu0 0.0
  %711 = vmatprep.subr.mxu0 0.0
  %712 = vmatpush2.msra.mxu0 0.0
  %713 = vmatprep.subr.mxu0 0.0
  %714 = vmatpush2.msra.mxu0 0.0
  %715 = vmatprep.subr.mxu0 0.0
  %716 = vmatpush2.msra.mxu0 0.0
  %717 = vmatprep.subr.mxu0 0.0
  %718 = vmatpush2.msra.mxu0 0.0
  %719 = vmatprep.subr.mxu0 0.0
  %720 = vmatpush2.msra.mxu0 0.0
  %721 = vmatprep.subr.mxu0 0.0
  %722 = vmatpush2.msra.mxu0 0.0
  %723 = vmatprep.subr.mxu0 0.0
  %724 = vmatpush2.msra.mxu0 0.0
  %725 = vmatprep.mubr.f32.mxu0 0.0
  %726 = vmatmul.mubr.f32.gmra.mxu0 %v638
  %v727 = vpop.f32.mrf.mxu0
  %v728 = vadd.f32 %v591, %v727
  %v729 = vpop.f32.mrf.mxu0
  %v730 = vadd.f32 %v593, %v729
  %731 = vmatprep.mubr.f32.mxu0 0.0
  %732 = vmatmul.mubr.f32.gmra.mxu0 %v641
  %v733 = vpop.f32.mrf.mxu0
  %v734 = vadd.f32 %v597, %v733
  %v735 = vpop.f32.mrf.mxu0
  %v736 = vadd.f32 %v599, %v735
  %737 = vmatprep.mubr.f32.mxu0 0.0
  %738 = vmatmul.mubr.f32.gmra.mxu0 %v644
  %v739 = vpop.f32.mrf.mxu0
  %v740 = vadd.f32 %v603, %v739
  %v741 = vpop.f32.mrf.mxu0
  %v742 = vadd.f32 %v605, %v741
  %743 = vmatprep.mubr.f32.mxu0 0.0
  %744 = vmatmul.mubr.f32.gmra.mxu0 %v647
  %v745 = vpop.f32.mrf.mxu0
  %v746 = vadd.f32 %v609, %v745
  %v747 = vpop.f32.mrf.mxu0
  %v748 = vadd.f32 %v611, %v747
  %749 = vmatprep.mubr.f32.mxu0 0.0
  %750 = vmatmul.mubr.f32.gmra.mxu0 %v650
  %v751 = vpop.f32.mrf.mxu0
  %v752 = vadd.f32 %v615, %v751
  %v753 = vpop.f32.mrf.mxu0
  %v754 = vadd.f32 %v617, %v753
  %755 = vmatprep.mubr.f32.mxu0 0.0
  %756 = vmatmul.mubr.f32.gmra.mxu0 %v653
  %v757 = vpop.f32.mrf.mxu0
  %v758 = vadd.f32 %v621, %v757
  %v759 = vpop.f32.mrf.mxu0
  %v760 = vadd.f32 %v623, %v759
  %761 = vmatprep.mubr.f32.mxu0 0.0
  %762 = vmatmul.mubr.f32.gmra.mxu0 %v656
  %v763 = vpop.f32.mrf.mxu0
  %v764 = vadd.f32 %v627, %v763
  %v765 = vpop.f32.mrf.mxu0
  %v766 = vadd.f32 %v629, %v765
  %767 = vmatprep.mubr.f32.mxu0 0.0
  %768 = vmatmul.mubr.f32.gmra.mxu0 %v659
  %v769 = vpop.f32.mrf.mxu0
  %v770 = vadd.f32 %v633, %v769
  %v771 = vpop.f32.mrf.mxu0
  %v772 = vadd.f32 %v635, %v771
  %773 = vdwg.mxu0
  %v774 = vld [vmem:[%s8] sm:$0x3]
  %v776 = vlaneseq
  %v777 = vshrl.u32 %v776, 7
  %v778 = vsub.s32 0, %v777
  %v779 = vrot.slane %v774, %v778
  %v780 = vlaneseq
  %v781 = vshrl.u32 %v780, 7
  %v782 = vsub.s32 1, %v781
  %v783 = vrot.slane %v774, %v782
  %v786 = vadd.f32 %v728, %v779
  %v787 = vadd.f32 %v730, %v783
  %v788 = vadd.f32 %v734, %v779
  %v789 = vadd.f32 %v736, %v783
  %v790 = vadd.f32 %v740, %v779
  %v791 = vadd.f32 %v742, %v783
  %v792 = vadd.f32 %v746, %v779
  %v793 = vadd.f32 %v748, %v783
  %v794 = vadd.f32 %v752, %v779
  %v795 = vadd.f32 %v754, %v783
  %v796 = vadd.f32 %v758, %v779
  %v797 = vadd.f32 %v760, %v783
  %v798 = vadd.f32 %v764, %v779
  %v799 = vadd.f32 %v766, %v783
  %v800 = vadd.f32 %v770, %v779
  %v801 = vadd.f32 %v772, %v783
  %802 = vst [vmem:[#allocation2] sm:$0xff] %v786
  %803 = vst [vmem:[#allocation2 + $0x8] sm:$0xff] %v787
  %804 = vst [vmem:[#allocation2 + $0x10] sm:$0xff] %v788
  %805 = vst [vmem:[#allocation2 + $0x18] sm:$0xff] %v789
  %806 = vst [vmem:[#allocation2 + $0x20] sm:$0xff] %v790
  %807 = vst [vmem:[#allocation2 + $0x28] sm:$0xff] %v791
  %808 = vst [vmem:[#allocation2 + $0x30] sm:$0xff] %v792
  %809 = vst [vmem:[#allocation2 + $0x38] sm:$0xff] %v793
  %810 = vst [vmem:[#allocation2 + $0x40] sm:$0xff] %v794
  %811 = vst [vmem:[#allocation2 + $0x48] sm:$0xff] %v795
  %812 = vst [vmem:[#allocation2 + $0x50] sm:$0xff] %v796
  %813 = vst [vmem:[#allocation2 + $0x58] sm:$0xff] %v797
  %814 = vst [vmem:[#allocation2 + $0x60] sm:$0xff] %v798
  %815 = vst [vmem:[#allocation2 + $0x68] sm:$0xff] %v799
  %816 = vst [vmem:[#allocation2 + $0x70] sm:$0xff] %v800
  %817 = vst [vmem:[#allocation2 + $0x78] sm:$0xff] %v801
  %818 = vst.msk [vmem:[#allocation5] sm:$0xff] %vm247, 0.0
  %819 = vst.msk [vmem:[#allocation6] sm:$0xff] %vm247, 0.0
  %v820 = vld [vmem:[%s7] sm:$0xff]
  %v821 = vld [vmem:[%s7 + $0x8] sm:$0xff]
  %v822 = vld [vmem:[%s7 + $0x10] sm:$0xff]
  %v823 = vld [vmem:[%s7 + $0x18] sm:$0xff]
  %v824 = vld [vmem:[%s7 + $0x20] sm:$0xff]
  %v825 = vld [vmem:[%s7 + $0x28] sm:$0xff]
  %v826 = vld [vmem:[%s7 + $0x30] sm:$0xff]
  %v827 = vld [vmem:[%s7 + $0x38] sm:$0xff]
  %v828 = vld [vmem:[%s7 + $0x40] sm:$0xff]
  %v829 = vld [vmem:[%s7 + $0x48] sm:$0xff]
  %v830 = vld [vmem:[%s7 + $0x50] sm:$0xff]
  %v831 = vld [vmem:[%s7 + $0x58] sm:$0xff]
  %v832 = vld [vmem:[%s7 + $0x60] sm:$0xff]
  %v833 = vld [vmem:[%s7 + $0x68] sm:$0xff]
  %v834 = vld [vmem:[%s7 + $0x70] sm:$0xff]
  %v835 = vld [vmem:[%s7 + $0x78] sm:$0xff]
  // While loop
  $region61: #{lstm_net_forward.1} parent=0 // loop_pre_header
    _
  $region62: #{lstm_net_forward.1} parent=0 // loop_header
    %s837 = sphi 0, %s839
    %p838 = scmp.ge.s32.totalorder %s837, %s48
  $region63: #{lstm_net_forward.1} parent=0 // loop_header_branch
    %841 = sbr.rel (%p838) target = $region67
  $region64: #{lstm_net_forward.1} parent=0 // loop_body
    %s842 = ssub.s32 %s48, 1
    %s843 = ssub.s32 %s842, %s837
    %v844 = vld [vmem:[#allocation5] sm:$0xff]
    %v845 = vld [vmem:[#allocation6] sm:$0xff]
    %v847 = vsel %vm247, %v844, 0
    %849 = vmatprep.subr.mxu0 0.0
    %850 = vmatpush1.msra.mxu0 0.0
    %851 = vmatprep.subr.mxu0 0.0
    %852 = vmatpush1.msra.mxu0 0.0
    %853 = vmatprep.subr.mxu0 0.0
    %854 = vmatpush1.msra.mxu0 0.0
    %855 = vmatprep.subr.mxu0 0.0
    %856 = vmatpush1.msra.mxu0 0.0
    %857 = vmatprep.subr.mxu0 0.0
    %858 = vmatpush1.msra.mxu0 0.0
    %859 = vmatprep.subr.mxu0 0.0
    %860 = vmatpush1.msra.mxu0 0.0
    %861 = vmatprep.subr.mxu0 0.0
    %862 = vmatpush1.msra.mxu0 0.0
    %863 = vmatprep.subr.mxu0 0.0
    %864 = vmatpush1.msra.mxu0 0.0
    %865 = vmatprep.subr.mxu0 %v835
    %866 = vmatpush1.msra.mxu0 %v834
    %867 = vmatprep.subr.mxu0 %v833
    %868 = vmatpush1.msra.mxu0 %v832
    %869 = vmatprep.subr.mxu0 %v831
    %870 = vmatpush1.msra.mxu0 %v830
    %871 = vmatprep.subr.mxu0 %v829
    %872 = vmatpush1.msra.mxu0 %v828
    %873 = vmatprep.subr.mxu0 %v827
    %874 = vmatpush1.msra.mxu0 %v826
    %875 = vmatprep.subr.mxu0 %v825
    %876 = vmatpush1.msra.mxu0 %v824
    %877 = vmatprep.subr.mxu0 %v823
    %878 = vmatpush1.msra.mxu0 %v822
    %879 = vmatprep.subr.mxu0 %v821
    %880 = vmatpush1.msra.mxu0 %v820
    %881 = vmatprep.subr.mxu0 0.0
    %882 = vmatpush2.msra.mxu0 0.0
    %883 = vmatprep.subr.mxu0 0.0
    %884 = vmatpush2.msra.mxu0 0.0
    %885 = vmatprep.subr.mxu0 0.0
    %886 = vmatpush2.msra.mxu0 0.0
    %887 = vmatprep.subr.mxu0 0.0
    %888 = vmatpush2.msra.mxu0 0.0
    %889 = vmatprep.subr.mxu0 0.0
    %890 = vmatpush2.msra.mxu0 0.0
    %891 = vmatprep.subr.mxu0 0.0
    %892 = vmatpush2.msra.mxu0 0.0
    %893 = vmatprep.subr.mxu0 0.0
    %894 = vmatpush2.msra.mxu0 0.0
    %895 = vmatprep.subr.mxu0 0.0
    %896 = vmatpush2.msra.mxu0 0.0
    %897 = vmatprep.subr.mxu0 0.0
    %898 = vmatpush2.msra.mxu0 0.0
    %899 = vmatprep.subr.mxu0 0.0
    %900 = vmatpush2.msra.mxu0 0.0
    %901 = vmatprep.subr.mxu0 0.0
    %902 = vmatpush2.msra.mxu0 0.0
    %903 = vmatprep.subr.mxu0 0.0
    %904 = vmatpush2.msra.mxu0 0.0
    %905 = vmatprep.subr.mxu0 0.0
    %906 = vmatpush2.msra.mxu0 0.0
    %907 = vmatprep.subr.mxu0 0.0
    %908 = vmatpush2.msra.mxu0 0.0
    %909 = vmatprep.subr.mxu0 0.0
    %910 = vmatpush2.msra.mxu0 0.0
    %911 = vmatprep.subr.mxu0 0.0
    %912 = vmatpush2.msra.mxu0 0.0
    %913 = vmatprep.mubr.f32.mxu0 0.0
    %914 = vmatmul.mubr.f32.gmra.mxu0 %v847
    %v915 = vpop.f32.mrf.mxu0
    %v916 = vadd.f32 0.0, %v915
    %v917 = vpop.f32.mrf.mxu0
    %v918 = vadd.f32 0.0, %v917
    %919 = vdwg.mxu0
    %s920 = smul.u32 %s837, 2
    %s921 = smul.addr %s920, 8
    %s922 = scalar_lea.vmem [#allocation2], %s921
    %v923 = vld [vmem:[%s922] sm:$0xff]
    %v924 = vadd.f32 %v916, %v923
    %s925 = smul.u32 %s843, 2
    %s926 = smul.addr %s925, 8
    %s927 = scalar_lea.vmem [#allocation2], %s926
    %v928 = vld [vmem:[%s927 + $0x8] sm:$0xff]
    %v929 = vadd.f32 %v918, %v928
    %v930 = vxor.u32 %v924, 2147483648
    %v931 = vmul.f32 %v930, 1.442695
    %v932 = vpow.pop %v931
    %v933 = vadd.f32 %v932, 1.0
    %v934 = vrcp.pop %v933
    %v935 = vmul.f32 1.0, %v934
    %v936 = vtanh.pop %v924
    %938 = vrot.lane.b32.xlu0 %v845, 32
    %v939 = vpop.permute.xlu0 %938
    %v941 = vmul.f32 %v935, %v939
    %943 = vrot.lane.b32.xlu0 %v936, 64
    %v944 = vpop.permute.xlu0 %943
    %v946 = vmul.f32 %v935, %v944
    %948 = vrot.lane.b32.xlu0 %v946, 32
    %v949 = vpop.permute.xlu0 %948
    %v951 = vadd.f32 %v941, %v949
    %v952 = vtanh.pop %v951
    %954 = vrot.lane.b32.xlu0 %v952, 64
    %v955 = vpop.permute.xlu0 %954
    %v957 = vmul.f32 %v935, %v955
    %v958 = vxor.u32 %v929, 2147483648
    %v959 = vmul.f32 %v958, 1.442695
    %v960 = vpow.pop %v959
    %v961 = vadd.f32 %v960, 1.0
    %v962 = vrcp.pop %v961
    %v963 = vmul.f32 1.0, %v962
    %v964 = vtanh.pop %v929
    %v965 = vmul.f32 %v963, %v845
    %967 = vrot.lane.b32.xlu0 %v964, 64
    %v968 = vpop.permute.xlu0 %967
    %v970 = vmul.f32 %v963, %v968
    %972 = vrot.lane.b32.xlu0 %v970, 32
    %v973 = vpop.permute.xlu0 %972
    %v975 = vadd.f32 %v965, %v973
    %v976 = vtanh.pop %v975
    %978 = vrot.lane.b32.xlu0 %v976, 64
    %v979 = vpop.permute.xlu0 %978
    %v981 = vmul.f32 %v963, %v979
    %v982 = vstv %s837
    %vm983 = vcmp.gt.s32.totalorder %v47, %v982
    %v984 = vstv %s843
    %vm985 = vcmp.gt.s32.totalorder %v47, %v984
    %v986 = vsel %vm983, 1, 0
    %987 = vset.pattern.permute.xlu0 0
    %988 = vperm.xlu0 %987, %v986
    %v989 = vpop.permute.xlu0 %988
    %vm990 = vcmp.eq.s32.totalorder %v989, 1
    %991 = vrot.lane.b32.xlu0 %v844, 96
    %v992 = vpop.permute.xlu0 %991
    %v994 = vsel %vm990, %v957, %v992
    %v995 = vsel %vm990, %v951, %v939
    %v996 = vsel %vm985, 1, 0
    %997 = vset.pattern.permute.xlu0 0
    %998 = vperm.xlu0 %997, %v996
    %v999 = vpop.permute.xlu0 %998
    %vm1000 = vcmp.eq.s32.totalorder %v999, 1
    %1001 = vrot.lane.b32.xlu0 %v844, 64
    %v1002 = vpop.permute.xlu0 %1001
    %v1004 = vsel %vm1000, %v981, %v1002
    %v1005 = vsel %vm1000, %v975, %v845
    %1007 = vrot.lane.b32.xlu0 %v994, 32
    %v1008 = vpop.permute.xlu0 %1007
    %1011 = vrot.lane.b32.xlu0 %v1004, 64
    %v1012 = vpop.permute.xlu0 %1011
    %v1014 = vsel %vm49, %v1008, %v1012
    %1015 = vst.msk [vmem:[#allocation5] sm:$0xff] %vm247, %v1014
    %1017 = vrot.lane.b32.xlu0 %v995, 96
    %v1018 = vpop.permute.xlu0 %1017
    %v1020 = vsel %vm49, %v1018, %v1005
    %1021 = vst.msk [vmem:[#allocation6] sm:$0xff] %vm247, %v1020
  $region65: #{lstm_net_forward.1} parent=0 // loop_footer
    %s839 = sadd.s32 %s837, 1
  $region66: #{lstm_net_forward.1} parent=0 // loop_footer_branch
    %836 = sbr.rel target = $region62
  $region67: #{lstm_net_forward.1} parent=0 // loop_exit
    _
  %v1022 = vld [vmem:[#allocation5] sm:$0xff]
  %v1023 = vld [vmem:[%s9] sm:$0xff]
  %v1024 = vld [vmem:[%s9 + $0x8] sm:$0xff]
  %v1025 = vld [vmem:[%s9 + $0x10] sm:$0xff]
  %v1026 = vld [vmem:[%s9 + $0x18] sm:$0xff]
  %v1027 = vld [vmem:[%s9 + $0x20] sm:$0xff]
  %v1028 = vld [vmem:[%s9 + $0x28] sm:$0xff]
  %v1029 = vld [vmem:[%s9 + $0x30] sm:$0xff]
  %v1030 = vld [vmem:[%s9 + $0x38] sm:$0xff]
  %v1031 = vld [vmem:[%s10] sm:$0x1]
  %v1033 = vlaneseq
  %v1034 = vshrl.u32 %v1033, 7
  %v1035 = vsub.s32 0, %v1034
  %v1036 = vrot.slane %v1031, %v1035
  %v1039 = vsel %vm247, %v1022, 0
  %1041 = vmatprep.subr.mxu0 0.0
  %1042 = vmatpush1.msra.mxu0 0.0
  %1043 = vmatprep.subr.mxu0 0.0
  %1044 = vmatpush1.msra.mxu0 0.0
  %1045 = vmatprep.subr.mxu0 0.0
  %1046 = vmatpush1.msra.mxu0 0.0
  %1047 = vmatprep.subr.mxu0 0.0
  %1048 = vmatpush1.msra.mxu0 0.0
  %1049 = vmatprep.subr.mxu0 0.0
  %1050 = vmatpush1.msra.mxu0 0.0
  %1051 = vmatprep.subr.mxu0 0.0
  %1052 = vmatpush1.msra.mxu0 0.0
  %1053 = vmatprep.subr.mxu0 0.0
  %1054 = vmatpush1.msra.mxu0 0.0
  %1055 = vmatprep.subr.mxu0 0.0
  %1056 = vmatpush1.msra.mxu0 0.0
  %1057 = vmatprep.subr.mxu0 0.0
  %1058 = vmatpush1.msra.mxu0 %v1030
  %1059 = vmatprep.subr.mxu0 0.0
  %1060 = vmatpush1.msra.mxu0 %v1029
  %1061 = vmatprep.subr.mxu0 0.0
  %1062 = vmatpush1.msra.mxu0 %v1028
  %1063 = vmatprep.subr.mxu0 0.0
  %1064 = vmatpush1.msra.mxu0 %v1027
  %1065 = vmatprep.subr.mxu0 0.0
  %1066 = vmatpush1.msra.mxu0 %v1026
  %1067 = vmatprep.subr.mxu0 0.0
  %1068 = vmatpush1.msra.mxu0 %v1025
  %1069 = vmatprep.subr.mxu0 0.0
  %1070 = vmatpush1.msra.mxu0 %v1024
  %1071 = vmatprep.subr.mxu0 0.0
  %1072 = vmatpush1.msra.mxu0 %v1023
  %1073 = vmatprep.subr.mxu0 0.0
  %1074 = vmatpush2.msra.mxu0 0.0
  %1075 = vmatprep.subr.mxu0 0.0
  %1076 = vmatpush2.msra.mxu0 0.0
  %1077 = vmatprep.subr.mxu0 0.0
  %1078 = vmatpush2.msra.mxu0 0.0
  %1079 = vmatprep.subr.mxu0 0.0
  %1080 = vmatpush2.msra.mxu0 0.0
  %1081 = vmatprep.subr.mxu0 0.0
  %1082 = vmatpush2.msra.mxu0 0.0
  %1083 = vmatprep.subr.mxu0 0.0
  %1084 = vmatpush2.msra.mxu0 0.0
  %1085 = vmatprep.subr.mxu0 0.0
  %1086 = vmatpush2.msra.mxu0 0.0
  %1087 = vmatprep.subr.mxu0 0.0
  %1088 = vmatpush2.msra.mxu0 0.0
  %1089 = vmatprep.subr.mxu0 0.0
  %1090 = vmatpush2.msra.mxu0 0.0
  %1091 = vmatprep.subr.mxu0 0.0
  %1092 = vmatpush2.msra.mxu0 0.0
  %1093 = vmatprep.subr.mxu0 0.0
  %1094 = vmatpush2.msra.mxu0 0.0
  %1095 = vmatprep.subr.mxu0 0.0
  %1096 = vmatpush2.msra.mxu0 0.0
  %1097 = vmatprep.subr.mxu0 0.0
  %1098 = vmatpush2.msra.mxu0 0.0
  %1099 = vmatprep.subr.mxu0 0.0
  %1100 = vmatpush2.msra.mxu0 0.0
  %1101 = vmatprep.subr.mxu0 0.0
  %1102 = vmatpush2.msra.mxu0 0.0
  %1103 = vmatprep.subr.mxu0 0.0
  %1104 = vmatpush2.msra.mxu0 0.0
  %1105 = vmatprep.mubr.f32.mxu0 0.0
  %1106 = vmatmul.mubr.f32.gmra.mxu0 %v1039
  %v1107 = vpop.f32.mrf.mxu0
  %v1108 = vadd.f32 %v1036, %v1107
  %v1109 = vpop.f32.mrf.mxu0
  %1110 = vdwg.mxu0
  %v1111 = vld [vmem:[%s11] sm:$0xff]
  %v1112 = vld [vmem:[%s11 + $0x8] sm:$0xff]
  %v1113 = vld [vmem:[%s11 + $0x10] sm:$0xff]
  %v1114 = vld [vmem:[%s11 + $0x18] sm:$0xff]
  %v1115 = vld [vmem:[#allocation8] sm:$0x1]
  %v1117 = vlaneseq
  %v1118 = vshrl.u32 %v1117, 7
  %v1119 = vsub.s32 0, %v1118
  %v1120 = vrot.slane %v1115, %v1119
  %v1123 = vsel %vm49, %v1108, 0
  %1125 = vmatprep.subr.mxu0 0.0
  %1126 = vmatpush1.msra.mxu0 0.0
  %1127 = vmatprep.subr.mxu0 0.0
  %1128 = vmatpush1.msra.mxu0 0.0
  %1129 = vmatprep.subr.mxu0 0.0
  %1130 = vmatpush1.msra.mxu0 0.0
  %1131 = vmatprep.subr.mxu0 0.0
  %1132 = vmatpush1.msra.mxu0 0.0
  %1133 = vmatprep.subr.mxu0 0.0
  %1134 = vmatpush1.msra.mxu0 0.0
  %1135 = vmatprep.subr.mxu0 0.0
  %1136 = vmatpush1.msra.mxu0 0.0
  %1137 = vmatprep.subr.mxu0 0.0
  %1138 = vmatpush1.msra.mxu0 0.0
  %1139 = vmatprep.subr.mxu0 0.0
  %1140 = vmatpush1.msra.mxu0 0.0
  %1141 = vmatprep.subr.mxu0 0.0
  %1142 = vmatpush1.msra.mxu0 0.0
  %1143 = vmatprep.subr.mxu0 0.0
  %1144 = vmatpush1.msra.mxu0 0.0
  %1145 = vmatprep.subr.mxu0 0.0
  %1146 = vmatpush1.msra.mxu0 0.0
  %1147 = vmatprep.subr.mxu0 0.0
  %1148 = vmatpush1.msra.mxu0 0.0
  %1149 = vmatprep.subr.mxu0 0.0
  %1150 = vmatpush1.msra.mxu0 %v1114
  %1151 = vmatprep.subr.mxu0 0.0
  %1152 = vmatpush1.msra.mxu0 %v1113
  %1153 = vmatprep.subr.mxu0 0.0
  %1154 = vmatpush1.msra.mxu0 %v1112
  %1155 = vmatprep.subr.mxu0 0.0
  %1156 = vmatpush1.msra.mxu0 %v1111
  %1157 = vmatprep.subr.mxu0 0.0
  %1158 = vmatpush2.msra.mxu0 0.0
  %1159 = vmatprep.subr.mxu0 0.0
  %1160 = vmatpush2.msra.mxu0 0.0
  %1161 = vmatprep.subr.mxu0 0.0
  %1162 = vmatpush2.msra.mxu0 0.0
  %1163 = vmatprep.subr.mxu0 0.0
  %1164 = vmatpush2.msra.mxu0 0.0
  %1165 = vmatprep.subr.mxu0 0.0
  %1166 = vmatpush2.msra.mxu0 0.0
  %1167 = vmatprep.subr.mxu0 0.0
  %1168 = vmatpush2.msra.mxu0 0.0
  %1169 = vmatprep.subr.mxu0 0.0
  %1170 = vmatpush2.msra.mxu0 0.0
  %1171 = vmatprep.subr.mxu0 0.0
  %1172 = vmatpush2.msra.mxu0 0.0
  %1173 = vmatprep.subr.mxu0 0.0
  %1174 = vmatpush2.msra.mxu0 0.0
  %1175 = vmatprep.subr.mxu0 0.0
  %1176 = vmatpush2.msra.mxu0 0.0
  %1177 = vmatprep.subr.mxu0 0.0
  %1178 = vmatpush2.msra.mxu0 0.0
  %1179 = vmatprep.subr.mxu0 0.0
  %1180 = vmatpush2.msra.mxu0 0.0
  %1181 = vmatprep.subr.mxu0 0.0
  %1182 = vmatpush2.msra.mxu0 0.0
  %1183 = vmatprep.subr.mxu0 0.0
  %1184 = vmatpush2.msra.mxu0 0.0
  %1185 = vmatprep.subr.mxu0 0.0
  %1186 = vmatpush2.msra.mxu0 0.0
  %1187 = vmatprep.subr.mxu0 0.0
  %1188 = vmatpush2.msra.mxu0 0.0
  %1189 = vmatprep.mubr.f32.mxu0 0.0
  %1190 = vmatmul.mubr.f32.gmra.mxu0 %v1123
  %v1191 = vpop.f32.mrf.mxu0
  %v1192 = vadd.f32 %v1120, %v1191
  %v1193 = vpop.f32.mrf.mxu0
  %1194 = vdwg.mxu0
  %vm1195 = vcmask 7168
  %1196 = vst.msk [vmem:[%s13] sm:$0xff] %vm1195, %v1192
  // Predicated region
  $region68: #{lstm_net_forward.1} parent=0 // pred_check
    _
  $region69: #{lstm_net_forward.1} parent=0 // pred_check_branch
    %1198 = sbr.rel (0) target = $region71
  $region70: #{lstm_net_forward.1} parent=0 // pred_region
    _
  $region71: #{lstm_net_forward.1} parent=0 // pred_fallthru
    _
  // Predicated region
  $region72: #{lstm_net_forward.1} parent=0 // pred_check
    _
  $region73: #{lstm_net_forward.1} parent=0 // pred_check_branch
    %1200 = sbr.rel (0) target = $region75
  $region74: #{lstm_net_forward.1} parent=0 // pred_region
    _
  $region75: #{lstm_net_forward.1} parent=0 // pred_fallthru
    _

</llo_original>
